<compile_context>
chip_gen: v7x
topology: tpu7x:2x2x1
jax: 0.10.0
libtpu: 0.0.40
codegen_flags: <defaults>
</compile_context>

<pallas_src>
import math
from functools import partial

import jax
import jax.numpy as jnp
from jax import lax
from jax.experimental import pallas as pl
from jax.experimental.pallas import tpu as pltpu

LN_EPS = 1e-5          # nn.LayerNorm default
ATTN_EPS = 1e-6        # LinearAttention normalizer eps


def _layer_norm(x, w, b):
    mean = jnp.mean(x, axis=-1, keepdims=True)
    var = jnp.mean(jnp.square(x - mean), axis=-1, keepdims=True)
    return (x - mean) * lax.rsqrt(var + LN_EPS) * w + b


def _elu_plus_one(x):
    # F.elu(x) + 1  ==  x + 1 (x > 0),  exp(x) (x <= 0)
    return jnp.where(x > 0, x + 1.0, jnp.exp(x))


def _gelu_exact(x):
    return 0.5 * x * (1.0 + lax.erf(x * (1.0 / math.sqrt(2.0))))


# ----------------------------------------------------------------------
# Pass 1: per-batch reduction  kv = blockdiag(K^T V)/N  and  k_mean = mean(K)
# ----------------------------------------------------------------------
def _kv_reduce_kernel(
    x_ref,               # (1, Tn, C) input tile
    n1w_ref, n1b_ref,    # (1, C) f32
    wk_ref, bk_ref,      # (C, C) bf16, (1, C) f32
    wv_ref, bv_ref,      # (C, C) bf16, (1, C) f32
    mask_ref,            # (C, C) bf16 block-diagonal same-head ones
    kv_ref,              # out (1, C, C) bf16
    kmean_ref,           # out (1, 1, C) f32
    kv_acc, ksum_acc,    # scratch: (C, C) f32, (1, C) f32
    *, n_tokens: int, tile_n: int, needs_mask: bool,
):
    t = pl.program_id(1)

    @pl.when(t == 0)
    def _():
        kv_acc[...] = jnp.zeros_like(kv_acc)
        ksum_acc[...] = jnp.zeros_like(ksum_acc)

    x = x_ref[0].astype(jnp.float32)
    xn1 = _layer_norm(x, n1w_ref[0], n1b_ref[0])

    if needs_mask:  # last tile may be partial: kill out-of-range rows
        row = lax.broadcasted_iota(jnp.int32, (tile_n, 1), 0)
        valid = (t * tile_n + row) < n_tokens
        xn1 = jnp.where(valid, xn1, 0.0)

    xn1_bf = xn1.astype(jnp.bfloat16)
    k = _elu_plus_one(jnp.dot(xn1_bf, wk_ref[...],
                              preferred_element_type=jnp.float32) + bk_ref[0])
    v = jnp.dot(xn1_bf, wv_ref[...],
                preferred_element_type=jnp.float32) + bv_ref[0]

    if needs_mask:  # elu(+bias)+1 of masked rows is nonzero -> zero them again
        k = jnp.where(valid, k, 0.0)
        v = jnp.where(valid, v, 0.0)

    # kv += K_tile^T @ V_tile  (f32 accumulation on the MXU)
    kv_acc[...] += lax.dot_general(
        k.astype(jnp.bfloat16), v.astype(jnp.bfloat16),
        (((0,), (0,)), ((), ())), preferred_element_type=jnp.float32)
    ksum_acc[...] += jnp.sum(k, axis=0, keepdims=True)

    @pl.when(t == pl.num_programs(1) - 1)
    def _():
        inv_n = 1.0 / n_tokens
        kv_ref[0] = (kv_acc[...] * inv_n
                     * mask_ref[...].astype(jnp.float32)).astype(jnp.bfloat16)
        kmean_ref[0] = ksum_acc[...] * inv_n


# ----------------------------------------------------------------------
# Pass 2: per token tile -> attention output + proj + MLP + residuals
# ----------------------------------------------------------------------
def _block_out_kernel(
    x_ref,                      # (1, Tn, C)
    kv_ref,                     # (1, C, C) bf16 (block-diag, already /N)
    kmean_ref,                  # (1, 1, C) f32
    mask_ref,                   # (C, C) bf16 block-diagonal ones
    n1w_ref, n1b_ref,           # (1, C) f32
    wq_ref, bq_ref,             # (C, C) bf16, (1, C) f32
    projw_ref, projb_ref,       # (C, C) bf16, (1, C) f32
    n2w_ref, n2b_ref,           # (1, C) f32
    fc1w_ref,                   # (C, Hm) bf16
    fc2w_ref,                   # (Hm, C) bf16
    o_ref,                      # (1, Tn, C)
):
    x = x_ref[0].astype(jnp.float32)
    xn1 = _layer_norm(x, n1w_ref[0], n1b_ref[0])
    q = _elu_plus_one(jnp.dot(xn1.astype(jnp.bfloat16), wq_ref[...],
                              preferred_element_type=jnp.float32) + bq_ref[0])
    q_bf = q.astype(jnp.bfloat16)

    # numerator: all heads at once against the block-diagonal kv (lane-dense)
    att = jnp.dot(q_bf, kv_ref[0], preferred_element_type=jnp.float32)

    # normalizer: per-head segment-sum of q*k_mean, broadcast back to the
    # head's lanes via the block-diagonal ones mask (one matmul, no slices).
    qk = (q * kmean_ref[0]).astype(jnp.bfloat16)
    denom = jnp.dot(qk, mask_ref[...], preferred_element_type=jnp.float32)
    att = att / (denom + ATTN_EPS)        # exact division (no approx recip)

    y = jnp.dot(att.astype(jnp.bfloat16), projw_ref[...],
                preferred_element_type=jnp.float32) + projb_ref[0]

    x1 = x + y
    xn2 = _layer_norm(x1, n2w_ref[0], n2b_ref[0])
    hidden = _gelu_exact(jnp.dot(xn2.astype(jnp.bfloat16), fc1w_ref[...],
                                 preferred_element_type=jnp.float32))
    mlp = jnp.dot(hidden.astype(jnp.bfloat16), fc2w_ref[...],
                  preferred_element_type=jnp.float32)
    o_ref[0] = (x1 + mlp).astype(o_ref.dtype)


# ----------------------------------------------------------------------
# Wrapper
# ----------------------------------------------------------------------
def _tpu_vmem_capacity():
    try:
        return int(pltpu.get_tpu_info().vmem_capacity_bytes)
    except Exception:
        return 64 << 20  # conservative (v7x-sized) fallback


def _vmem_limit_bytes():
    phys = _tpu_vmem_capacity()
    # leave headroom for Mosaic-internal scratch: ~48 MiB on v7x (64 MiB
    # physical), capped ~100 MiB on v5e/v6e (128 MiB physical).
    return int(max(32 << 20, min(phys - (16 << 20), 100 << 20)))


def _pick_token_tile(n_tokens):
    phys = _tpu_vmem_capacity()
    target = 256 if phys <= (64 << 20) else 512
    return n_tokens if n_tokens <= target else target


def prepare_decoder_params(params, num_heads):
    """One-time weight preprocessing (qkv split, transposes, bf16 casts,
    same-head mask) — hoisted out of the per-forward path."""
    f32, bf16 = jnp.float32, jnp.bfloat16
    qkv_w = jnp.asarray(params["qkv_w"], f32)                  # (3C, C) (out, in)
    C = qkv_w.shape[1]
    head_dim = C // num_heads

    qkv_b = jnp.asarray(params["qkv_b"], f32)
    p = {
        "wq": qkv_w[0 * C:1 * C].T.astype(bf16),               # (C, C) (in, out)
        "wk": qkv_w[1 * C:2 * C].T.astype(bf16),
        "wv": qkv_w[2 * C:3 * C].T.astype(bf16),
        "bq": qkv_b[0 * C:1 * C].reshape(1, C),
        "bk": qkv_b[1 * C:2 * C].reshape(1, C),
        "bv": qkv_b[2 * C:3 * C].reshape(1, C),
        "proj_w": jnp.asarray(params["proj_w"], f32).T.astype(bf16),
        "proj_b": jnp.asarray(params["proj_b"], f32).reshape(1, C),
        "fc1_w": jnp.asarray(params["fc1_w"], f32).T.astype(bf16),   # (C, Hm)
        "fc2_w": jnp.asarray(params["fc2_w"], f32).T.astype(bf16),   # (Hm, C)
        "n1w": jnp.asarray(params["norm1_w"], f32).reshape(1, C),
        "n1b": jnp.asarray(params["norm1_b"], f32).reshape(1, C),
        "n2w": jnp.asarray(params["norm2_w"], f32).reshape(1, C),
        "n2b": jnp.asarray(params["norm2_b"], f32).reshape(1, C),
    }
    head_of = jnp.arange(C) // head_dim
    p["head_mask"] = (head_of[:, None] == head_of[None, :]).astype(bf16)
    return p


def _const_spec(shape):
    zeros = tuple(0 for _ in shape)
    # grid-invariant operand: single-buffered (no 2x weight allocation)
    return pl.BlockSpec(shape, lambda *_: zeros, pipeline_mode=pl.Buffered(1))


def decoder_vit_block(x, p):
    """Pallas implementation of DecoderViTBlock.forward (eval, no mask)."""
    B, N, C = x.shape
    Hm = p["fc1_w"].shape[1]
    tile_n = _pick_token_tile(N)
    num_tiles = pl.cdiv(N, tile_n)
    needs_mask = (tile_n * num_tiles != N)
    vmem_limit = _vmem_limit_bytes()

    # ---- pass 1: per-batch kv / k_mean reduction over token tiles ----------
    kv_bd, k_mean = pl.pallas_call(
        partial(_kv_reduce_kernel, n_tokens=N, tile_n=tile_n,
                needs_mask=needs_mask),
        out_shape=(jax.ShapeDtypeStruct((B, C, C), jnp.bfloat16),
                   jax.ShapeDtypeStruct((B, 1, C), jnp.float32)),
        grid_spec=pltpu.PrefetchScalarGridSpec(
            num_scalar_prefetch=0,
            grid=(B, num_tiles),
            in_specs=[
                pl.BlockSpec((1, tile_n, C), lambda b, t: (b, t, 0)),   # x
                _const_spec((1, C)), _const_spec((1, C)),               # norm1 w/b
                _const_spec((C, C)), _const_spec((1, C)),               # Wk, bk
                _const_spec((C, C)), _const_spec((1, C)),               # Wv, bv
                _const_spec((C, C)),                                    # head mask
            ],
            out_specs=(
                pl.BlockSpec((1, C, C), lambda b, t: (b, 0, 0)),
                pl.BlockSpec((1, 1, C), lambda b, t: (b, 0, 0)),
            ),
            scratch_shapes=[pltpu.VMEM((C, C), jnp.float32),
                            pltpu.VMEM((1, C), jnp.float32)],
        ),
        compiler_params=pltpu.CompilerParams(
            dimension_semantics=("parallel", "arbitrary"),
            vmem_limit_bytes=vmem_limit),
    )(x, p["n1w"], p["n1b"], p["wk"], p["bk"], p["wv"], p["bv"], p["head_mask"])

    # ---- pass 2: per token tile attention + proj + MLP + residuals ---------
    out = pl.pallas_call(
        _block_out_kernel,
        out_shape=jax.ShapeDtypeStruct((B, N, C), x.dtype),
        grid_spec=pltpu.PrefetchScalarGridSpec(
            num_scalar_prefetch=0,
            grid=(B, num_tiles),
            in_specs=[
                pl.BlockSpec((1, tile_n, C), lambda b, t: (b, t, 0)),   # x
                pl.BlockSpec((1, C, C), lambda b, t: (b, 0, 0)),        # kv
                pl.BlockSpec((1, 1, C), lambda b, t: (b, 0, 0)),        # k_mean
                _const_spec((C, C)),                                    # head mask
                _const_spec((1, C)), _const_spec((1, C)),               # norm1 w/b
                _const_spec((C, C)), _const_spec((1, C)),               # Wq, bq
                _const_spec((C, C)), _const_spec((1, C)),               # Wproj, bproj
                _const_spec((1, C)), _const_spec((1, C)),               # norm2 w/b
                _const_spec((C, Hm)),                                   # fc1 W^T
                _const_spec((Hm, C)),                                   # fc2 W^T
            ],
            out_specs=pl.BlockSpec((1, tile_n, C), lambda b, t: (b, t, 0)),
        ),
        compiler_params=pltpu.CompilerParams(
            dimension_semantics=("parallel", "parallel"),
            vmem_limit_bytes=vmem_limit),
    )(x, kv_bd, k_mean, p["head_mask"], p["n1w"], p["n1b"],
      p["wq"], p["bq"], p["proj_w"], p["proj_b"],
      p["n2w"], p["n2b"], p["fc1_w"], p["fc2_w"])
    return out


# ----------------------------------------------------------------------
# Pure-JAX f32 reference (mirrors the PyTorch forward exactly).
# ----------------------------------------------------------------------
def reference_forward(x, p, num_heads):
    B, N, C = x.shape
    d = C // num_heads

    def ln(y, w, b):
        m = y.mean(-1, keepdims=True)
        var = ((y - m) ** 2).mean(-1, keepdims=True)
        return (y - m) / jnp.sqrt(var + LN_EPS) * w + b

    xn = ln(x, p["norm1_w"], p["norm1_b"])
    qkv = xn @ p["qkv_w"].T + p["qkv_b"]                      # (B,N,3C)
    qkv = qkv.reshape(B, N, 3, num_heads, d).transpose(2, 0, 3, 1, 4)
    q, k, v = qkv[0], qkv[1], qkv[2]                          # (B,H,N,d)
    q = jnp.where(q > 0, q + 1.0, jnp.exp(q))
    k = jnp.where(k > 0, k + 1.0, jnp.exp(k))
    kv = jnp.einsum("bhnd,bhne->bhde", k, v) * (1.0 / N)
    k_mean = k.mean(axis=2, keepdims=True)                    # (B,H,1,d)
    z = 1.0 / (jnp.einsum("bhnd,bhmd->bhnm", q, k_mean) + ATTN_EPS)
    att = jnp.einsum("bhnd,bhde->bhne", q, kv) * z
    att = att.transpose(0, 2, 1, 3).reshape(B, N, C)
    y = att @ p["proj_w"].T + p["proj_b"]
    x1 = x + y
    xn2 = ln(x1, p["norm2_w"], p["norm2_b"])
    hidden = _gelu_exact(xn2 @ p["fc1_w"].T)
    mlp = hidden @ p["fc2_w"].T
    return x1 + mlp


if __name__ == "__main__":
    # Small shapes consistent with the module: dim=32, num_heads=4,
    # mlp_ratio=4.0 -> hidden=128, tokens=16, batch=2.
    B, N, C, H = 2, 16, 32, 4
    Hm = int(C * 4.0)

    key = jax.random.PRNGKey(0)
    ks = jax.random.split(key, 12)
    params = {
        "norm1_w": jnp.ones((C,), jnp.float32) + 0.01 * jax.random.normal(ks[0], (C,), jnp.float32),
        "norm1_b": 0.01 * jax.random.normal(ks[1], (C,), jnp.float32),
        "qkv_w":   0.05 * jax.random.normal(ks[2], (3 * C, C), jnp.float32),
        "qkv_b":   0.01 * jax.random.normal(ks[3], (3 * C,), jnp.float32),
        "proj_w":  0.05 * jax.random.normal(ks[4], (C, C), jnp.float32),
        "proj_b":  0.01 * jax.random.normal(ks[5], (C,), jnp.float32),
        "norm2_w": jnp.ones((C,), jnp.float32) + 0.01 * jax.random.normal(ks[6], (C,), jnp.float32),
        "norm2_b": 0.01 * jax.random.normal(ks[7], (C,), jnp.float32),
        "fc1_w":   0.05 * jax.random.normal(ks[8], (Hm, C), jnp.float32),   # bias=False
        "fc2_w":   0.05 * jax.random.normal(ks[9], (C, Hm), jnp.float32),   # bias=False
    }
    x = jax.random.normal(ks[10], (B, N, C), jnp.float32)

    # one-time weight preprocessing, then the (jit-able) forward
    prepared = prepare_decoder_params(params, num_heads=H)
    fwd = jax.jit(decoder_vit_block)
    out = jax.block_until_ready(fwd(x, prepared))

    ref = reference_forward(x, params, H)
    assert out.shape == (B, N, C)
    # bf16 matmul path vs f32 reference -> relaxed tolerance.
    err = jnp.max(jnp.abs(out - ref))
    assert jnp.allclose(out, ref, atol=2e-2, rtol=2e-2), f"max abs err {err}"
    print("KERNEL_OK")
</pallas_src>

<mosaic_0001>
module attributes {stable_mosaic.version = 11 : i64} {
  func.func @_kv_reduce_kernel(%arg0: i32, %arg1: i32, %arg2: memref<1x16x32xf32, #tpu.memory_space<vmem>>, %arg3: memref<1x32xf32, #tpu.memory_space<vmem>>, %arg4: memref<1x32xf32, #tpu.memory_space<vmem>>, %arg5: memref<32x32xbf16, #tpu.memory_space<vmem>>, %arg6: memref<1x32xf32, #tpu.memory_space<vmem>>, %arg7: memref<32x32xbf16, #tpu.memory_space<vmem>>, %arg8: memref<1x32xf32, #tpu.memory_space<vmem>>, %arg9: memref<32x32xbf16, #tpu.memory_space<vmem>>, %arg10: memref<1x32x32xbf16, #tpu.memory_space<vmem>>, %arg11: memref<1x1x32xf32, #tpu.memory_space<vmem>>, %arg12: memref<32x32xf32, #tpu.memory_space<vmem>>, %arg13: memref<1x32xf32, #tpu.memory_space<vmem>>) attributes {dimension_semantics = [#tpu.dimension_semantics<parallel>, #tpu.dimension_semantics<arbitrary>], iteration_bounds = array<i64: 2, 1>, scalar_prefetch = 0 : i64, scratch_operands = 2 : i64, tpu.core_type = #tpu.core_type<tc>, window_params = [{transform_indices = @transform_0, window_bounds = array<i64: 1, 16, 32>}, {pipeline_mode = #tpu.pipeline_mode<synchronous>, transform_indices = @transform_1, window_bounds = array<i64: 1, 32>}, {pipeline_mode = #tpu.pipeline_mode<synchronous>, transform_indices = @transform_2, window_bounds = array<i64: 1, 32>}, {pipeline_mode = #tpu.pipeline_mode<synchronous>, transform_indices = @transform_3, window_bounds = array<i64: 32, 32>}, {pipeline_mode = #tpu.pipeline_mode<synchronous>, transform_indices = @transform_4, window_bounds = array<i64: 1, 32>}, {pipeline_mode = #tpu.pipeline_mode<synchronous>, transform_indices = @transform_5, window_bounds = array<i64: 32, 32>}, {pipeline_mode = #tpu.pipeline_mode<synchronous>, transform_indices = @transform_6, window_bounds = array<i64: 1, 32>}, {pipeline_mode = #tpu.pipeline_mode<synchronous>, transform_indices = @transform_7, window_bounds = array<i64: 32, 32>}, {transform_indices = @transform_8, window_bounds = array<i64: 1, 32, 32>}, {transform_indices = @transform_9, window_bounds = array<i64: 1, 1, 32>}]} {
    %c0_i32 = arith.constant 0 : i32
    %0 = arith.cmpi eq, %arg1, %c0_i32 : i32
    %1 = arith.extui %0 : i1 to i32
    %c0_i32_0 = arith.constant 0 : i32
    %2 = arith.cmpi ne, %1, %c0_i32_0 : i32
    scf.if %2 {
      %cst_35 = arith.constant 0.000000e+00 : f32
      %68 = vector.broadcast %cst_35 : f32 to vector<32x32xf32>
      %c0_36 = arith.constant 0 : index
      %c0_37 = arith.constant 0 : index
      %69 = vector.load %arg12[%c0_36, %c0_37] : memref<32x32xf32, #tpu.memory_space<vmem>>, vector<32x32xf32>
      tpu.vector_store %arg12[%c0_36, %c0_37], %68 {strides = array<i32>} : memref<32x32xf32, #tpu.memory_space<vmem>>, vector<32x32xf32>,
      %cst_38 = arith.constant 0.000000e+00 : f32
      %70 = vector.broadcast %cst_38 : f32 to vector<1x32xf32>
      %c0_39 = arith.constant 0 : index
      %c0_40 = arith.constant 0 : index
      %71 = vector.load %arg13[%c0_39, %c0_40] : memref<1x32xf32, #tpu.memory_space<vmem>>, vector<1x32xf32>
      tpu.vector_store %arg13[%c0_39, %c0_40], %70 {strides = array<i32>} : memref<1x32xf32, #tpu.memory_space<vmem>>, vector<1x32xf32>,
    } else {
    }
    %c0 = arith.constant 0 : index
    %c0_1 = arith.constant 0 : index
    %c0_2 = arith.constant 0 : index
    %3 = vector.load %arg2[%c0, %c0_1, %c0_2] : memref<1x16x32xf32, #tpu.memory_space<vmem>>, vector<1x16x32xf32>
    %4 = vector.shape_cast %3 : vector<1x16x32xf32> to vector<16x32xf32>
    %c0_3 = arith.constant 0 : index
    %c0_4 = arith.constant 0 : index
    %5 = vector.load %arg3[%c0_3, %c0_4] : memref<1x32xf32, #tpu.memory_space<vmem>>, vector<1x32xf32>
    %6 = vector.shape_cast %5 : vector<1x32xf32> to vector<32xf32>
    %c0_5 = arith.constant 0 : index
    %c0_6 = arith.constant 0 : index
    %7 = vector.load %arg4[%c0_5, %c0_6] : memref<1x32xf32, #tpu.memory_space<vmem>>, vector<1x32xf32>
    %8 = vector.shape_cast %7 : vector<1x32xf32> to vector<32xf32>
    %cst = arith.constant dense<0.000000e+00> : vector<16xf32>
    %9 = vector.multi_reduction <add>, %4, %cst [1] : vector<16x32xf32> to vector<16xf32>
    %10 = vector.shape_cast %9 : vector<16xf32> to vector<16x1xf32>
    %cst_7 = arith.constant 3.200000e+01 : f32
    %11 = vector.broadcast %cst_7 : f32 to vector<16x1xf32>
    %12 = arith.divf %10, %11 : vector<16x1xf32>
    %13 = vector.broadcast %12 : vector<16x1xf32> to vector<16x32xf32>
    %14 = arith.subf %4, %13 : vector<16x32xf32>
    %15 = arith.mulf %14, %14 : vector<16x32xf32>
    %cst_8 = arith.constant dense<0.000000e+00> : vector<16xf32>
    %16 = vector.multi_reduction <add>, %15, %cst_8 [1] : vector<16x32xf32> to vector<16xf32>
    %17 = vector.shape_cast %16 : vector<16xf32> to vector<16x1xf32>
    %cst_9 = arith.constant 3.200000e+01 : f32
    %18 = vector.broadcast %cst_9 : f32 to vector<16x1xf32>
    %19 = arith.divf %17, %18 : vector<16x1xf32>
    %20 = vector.broadcast %12 : vector<16x1xf32> to vector<16x32xf32>
    %21 = arith.subf %4, %20 : vector<16x32xf32>
    %cst_10 = arith.constant 9.99999974E-6 : f32
    %22 = vector.broadcast %cst_10 : f32 to vector<16x1xf32>
    %23 = arith.addf %19, %22 : vector<16x1xf32>
    %24 = math.rsqrt %23 : vector<16x1xf32>
    %25 = vector.broadcast %24 : vector<16x1xf32> to vector<16x32xf32>
    %26 = arith.mulf %21, %25 : vector<16x32xf32>
    %27 = vector.shape_cast %6 : vector<32xf32> to vector<1x32xf32>
    %28 = vector.broadcast %27 : vector<1x32xf32> to vector<16x32xf32>
    %29 = arith.mulf %26, %28 : vector<16x32xf32>
    %30 = vector.shape_cast %8 : vector<32xf32> to vector<1x32xf32>
    %31 = vector.broadcast %30 : vector<1x32xf32> to vector<16x32xf32>
    %32 = arith.addf %29, %31 : vector<16x32xf32>
    %33 = arith.truncf %32 : vector<16x32xf32> to vector<16x32xbf16>
    %c0_11 = arith.constant 0 : index
    %c0_12 = arith.constant 0 : index
    %34 = vector.load %arg5[%c0_11, %c0_12] : memref<32x32xbf16, #tpu.memory_space<vmem>>, vector<32x32xbf16>
    %cst_13 = arith.constant dense<0.000000e+00> : vector<16x32xf32>
    %35 = tpu.matmul %33, %34, %cst_13 {dimension_numbers = #tpu.dot_dimension_numbers<[1], [0], [0], [1], [0, 0, 1, 1], [], []>} : vector<16x32xbf16>, vector<32x32xbf16>, vector<16x32xf32> -> vector<16x32xf32>
    %c0_14 = arith.constant 0 : index
    %c0_15 = arith.constant 0 : index
    %36 = vector.load %arg6[%c0_14, %c0_15] : memref<1x32xf32, #tpu.memory_space<vmem>>, vector<1x32xf32>
    %37 = vector.shape_cast %36 : vector<1x32xf32> to vector<32xf32>
    %38 = vector.shape_cast %37 : vector<32xf32> to vector<1x32xf32>
    %39 = vector.broadcast %38 : vector<1x32xf32> to vector<16x32xf32>
    %40 = arith.addf %35, %39 : vector<16x32xf32>
    %cst_16 = arith.constant 0.000000e+00 : f32
    %41 = vector.broadcast %cst_16 : f32 to vector<16x32xf32>
    %42 = arith.cmpf ogt, %40, %41 : vector<16x32xf32>
    %cst_17 = arith.constant 1.000000e+00 : f32
    %43 = vector.broadcast %cst_17 : f32 to vector<16x32xf32>
    %44 = arith.addf %40, %43 : vector<16x32xf32>
    %45 = math.exp %40 : vector<16x32xf32>
    %46 = arith.select %42, %44, %45 : vector<16x32xi1>, vector<16x32xf32>
    %c0_18 = arith.constant 0 : index
    %c0_19 = arith.constant 0 : index
    %47 = vector.load %arg7[%c0_18, %c0_19] : memref<32x32xbf16, #tpu.memory_space<vmem>>, vector<32x32xbf16>
    %cst_20 = arith.constant dense<0.000000e+00> : vector<16x32xf32>
    %48 = tpu.matmul %33, %47, %cst_20 {dimension_numbers = #tpu.dot_dimension_numbers<[1], [0], [0], [1], [0, 0, 1, 1], [], []>} : vector<16x32xbf16>, vector<32x32xbf16>, vector<16x32xf32> -> vector<16x32xf32>
    %c0_21 = arith.constant 0 : index
    %c0_22 = arith.constant 0 : index
    %49 = vector.load %arg8[%c0_21, %c0_22] : memref<1x32xf32, #tpu.memory_space<vmem>>, vector<1x32xf32>
    %50 = vector.shape_cast %49 : vector<1x32xf32> to vector<32xf32>
    %51 = vector.shape_cast %50 : vector<32xf32> to vector<1x32xf32>
    %52 = vector.broadcast %51 : vector<1x32xf32> to vector<16x32xf32>
    %53 = arith.addf %48, %52 : vector<16x32xf32>
    %c0_23 = arith.constant 0 : index
    %c0_24 = arith.constant 0 : index
    %54 = vector.load %arg12[%c0_23, %c0_24] : memref<32x32xf32, #tpu.memory_space<vmem>>, vector<32x32xf32>
    %55 = arith.truncf %46 : vector<16x32xf32> to vector<16x32xbf16>
    %56 = arith.truncf %53 : vector<16x32xf32> to vector<16x32xbf16>
    %cst_25 = arith.constant dense<0.000000e+00> : vector<32x32xf32>
    %57 = tpu.matmul %55, %56, %cst_25 {dimension_numbers = #tpu.dot_dimension_numbers<[0], [0], [1], [1], [0, 1, 1, 1], [], []>} : vector<16x32xbf16>, vector<16x32xbf16>, vector<32x32xf32> -> vector<32x32xf32>
    %58 = arith.addf %54, %57 : vector<32x32xf32>
    %c0_26 = arith.constant 0 : index
    %c0_27 = arith.constant 0 : index
    %59 = vector.load %arg12[%c0_26, %c0_27] : memref<32x32xf32, #tpu.memory_space<vmem>>, vector<32x32xf32>
    tpu.vector_store %arg12[%c0_26, %c0_27], %58 {strides = array<i32>} : memref<32x32xf32, #tpu.memory_space<vmem>>, vector<32x32xf32>,
    %c0_28 = arith.constant 0 : index
    %c0_29 = arith.constant 0 : index
    %60 = vector.load %arg13[%c0_28, %c0_29] : memref<1x32xf32, #tpu.memory_space<vmem>>, vector<1x32xf32>
    %cst_30 = arith.constant dense<0.000000e+00> : vector<32xf32>
    %61 = vector.multi_reduction <add>, %46, %cst_30 [0] : vector<16x32xf32> to vector<32xf32>
    %62 = vector.shape_cast %61 : vector<32xf32> to vector<1x32xf32>
    %63 = arith.addf %60, %62 : vector<1x32xf32>
    %c0_31 = arith.constant 0 : index
    %c0_32 = arith.constant 0 : index
    %64 = vector.load %arg13[%c0_31, %c0_32] : memref<1x32xf32, #tpu.memory_space<vmem>>, vector<1x32xf32>
    tpu.vector_store %arg13[%c0_31, %c0_32], %63 {strides = array<i32>} : memref<1x32xf32, #tpu.memory_space<vmem>>, vector<1x32xf32>,
    %c0_i32_33 = arith.constant 0 : i32
    %65 = arith.cmpi eq, %arg1, %c0_i32_33 : i32
    %66 = arith.extui %65 : i1 to i32
    %c0_i32_34 = arith.constant 0 : i32
    %67 = arith.cmpi ne, %66, %c0_i32_34 : i32
    scf.if %67 {
      %c0_35 = arith.constant 0 : index
      %c0_36 = arith.constant 0 : index
      %68 = vector.load %arg12[%c0_35, %c0_36] : memref<32x32xf32, #tpu.memory_space<vmem>>, vector<32x32xf32>
      %cst_37 = arith.constant 6.250000e-02 : f32
      %69 = vector.broadcast %cst_37 : f32 to vector<32x32xf32>
      %70 = arith.mulf %68, %69 : vector<32x32xf32>
      %c0_38 = arith.constant 0 : index
      %c0_39 = arith.constant 0 : index
      %71 = vector.load %arg9[%c0_38, %c0_39] : memref<32x32xbf16, #tpu.memory_space<vmem>>, vector<32x32xbf16>
      %72 = arith.extf %71 : vector<32x32xbf16> to vector<32x32xf32>
      %73 = arith.mulf %70, %72 : vector<32x32xf32>
      %74 = arith.truncf %73 : vector<32x32xf32> to vector<32x32xbf16>
      %c0_40 = arith.constant 0 : index
      %c0_41 = arith.constant 0 : index
      %c0_42 = arith.constant 0 : index
      %75 = vector.load %arg10[%c0_40, %c0_41, %c0_42] : memref<1x32x32xbf16, #tpu.memory_space<vmem>>, vector<1x32x32xbf16>
      %76 = vector.shape_cast %75 : vector<1x32x32xbf16> to vector<32x32xbf16>
      %77 = vector.shape_cast %74 : vector<32x32xbf16> to vector<1x32x32xbf16>
      tpu.vector_store %arg10[%c0_40, %c0_41, %c0_42], %77 {strides = array<i32>} : memref<1x32x32xbf16, #tpu.memory_space<vmem>>, vector<1x32x32xbf16>,
      %c0_43 = arith.constant 0 : index
      %c0_44 = arith.constant 0 : index
      %78 = vector.load %arg13[%c0_43, %c0_44] : memref<1x32xf32, #tpu.memory_space<vmem>>, vector<1x32xf32>
      %cst_45 = arith.constant 6.250000e-02 : f32
      %79 = vector.broadcast %cst_45 : f32 to vector<1x32xf32>
      %80 = arith.mulf %78, %79 : vector<1x32xf32>
      %c0_46 = arith.constant 0 : index
      %c0_47 = arith.constant 0 : index
      %c0_48 = arith.constant 0 : index
      %81 = vector.load %arg11[%c0_46, %c0_47, %c0_48] : memref<1x1x32xf32, #tpu.memory_space<vmem>>, vector<1x1x32xf32>
      %82 = vector.shape_cast %81 : vector<1x1x32xf32> to vector<1x32xf32>
      %83 = vector.shape_cast %80 : vector<1x32xf32> to vector<1x1x32xf32>
      tpu.vector_store %arg11[%c0_46, %c0_47, %c0_48], %83 {strides = array<i32>} : memref<1x1x32xf32, #tpu.memory_space<vmem>>, vector<1x1x32xf32>,
    } else {
    }
    return
  }
  func.func @transform_0(%arg0: i32, %arg1: i32) -> (i32, i32, i32) {
    %c0_i32 = arith.constant 0 : i32
    %c0_i32_0 = arith.constant 0 : i32
    return %arg0, %arg1, %c0_i32 : i32, i32, i32
  }
  func.func @transform_1(%arg0: i32, %arg1: i32) -> (i32, i32) {
    %c0_i32 = arith.constant 0 : i32
    %c0_i32_0 = arith.constant 0 : i32
    %c0_i32_1 = arith.constant 0 : i32
    return %c0_i32, %c0_i32_0 : i32, i32
  }
  func.func @transform_2(%arg0: i32, %arg1: i32) -> (i32, i32) {
    %c0_i32 = arith.constant 0 : i32
    %c0_i32_0 = arith.constant 0 : i32
    %c0_i32_1 = arith.constant 0 : i32
    return %c0_i32, %c0_i32_0 : i32, i32
  }
  func.func @transform_3(%arg0: i32, %arg1: i32) -> (i32, i32) {
    %c0_i32 = arith.constant 0 : i32
    %c0_i32_0 = arith.constant 0 : i32
    %c0_i32_1 = arith.constant 0 : i32
    return %c0_i32, %c0_i32_0 : i32, i32
  }
  func.func @transform_4(%arg0: i32, %arg1: i32) -> (i32, i32) {
    %c0_i32 = arith.constant 0 : i32
    %c0_i32_0 = arith.constant 0 : i32
    %c0_i32_1 = arith.constant 0 : i32
    return %c0_i32, %c0_i32_0 : i32, i32
  }
  func.func @transform_5(%arg0: i32, %arg1: i32) -> (i32, i32) {
    %c0_i32 = arith.constant 0 : i32
    %c0_i32_0 = arith.constant 0 : i32
    %c0_i32_1 = arith.constant 0 : i32
    return %c0_i32, %c0_i32_0 : i32, i32
  }
  func.func @transform_6(%arg0: i32, %arg1: i32) -> (i32, i32) {
    %c0_i32 = arith.constant 0 : i32
    %c0_i32_0 = arith.constant 0 : i32
    %c0_i32_1 = arith.constant 0 : i32
    return %c0_i32, %c0_i32_0 : i32, i32
  }
  func.func @transform_7(%arg0: i32, %arg1: i32) -> (i32, i32) {
    %c0_i32 = arith.constant 0 : i32
    %c0_i32_0 = arith.constant 0 : i32
    %c0_i32_1 = arith.constant 0 : i32
    return %c0_i32, %c0_i32_0 : i32, i32
  }
  func.func @transform_8(%arg0: i32, %arg1: i32) -> (i32, i32, i32) {
    %c0_i32 = arith.constant 0 : i32
    %c0_i32_0 = arith.constant 0 : i32
    %c0_i32_1 = arith.constant 0 : i32
    return %arg0, %c0_i32, %c0_i32_0 : i32, i32, i32
  }
  func.func @transform_9(%arg0: i32, %arg1: i32) -> (i32, i32, i32) {
    %c0_i32 = arith.constant 0 : i32
    %c0_i32_0 = arith.constant 0 : i32
    %c0_i32_1 = arith.constant 0 : i32
    return %arg0, %c0_i32, %c0_i32_0 : i32, i32, i32
  }
}

module attributes {stable_mosaic.version = 11 : i64} {
  func.func @_block_out_kernel(%arg0: i32, %arg1: i32, %arg2: memref<1x16x32xf32, #tpu.memory_space<vmem>>, %arg3: memref<1x32x32xbf16, #tpu.memory_space<vmem>>, %arg4: memref<1x1x32xf32, #tpu.memory_space<vmem>>, %arg5: memref<32x32xbf16, #tpu.memory_space<vmem>>, %arg6: memref<1x32xf32, #tpu.memory_space<vmem>>, %arg7: memref<1x32xf32, #tpu.memory_space<vmem>>, %arg8: memref<32x32xbf16, #tpu.memory_space<vmem>>, %arg9: memref<1x32xf32, #tpu.memory_space<vmem>>, %arg10: memref<32x32xbf16, #tpu.memory_space<vmem>>, %arg11: memref<1x32xf32, #tpu.memory_space<vmem>>, %arg12: memref<1x32xf32, #tpu.memory_space<vmem>>, %arg13: memref<1x32xf32, #tpu.memory_space<vmem>>, %arg14: memref<32x128xbf16, #tpu.memory_space<vmem>>, %arg15: memref<128x32xbf16, #tpu.memory_space<vmem>>, %arg16: memref<1x16x32xf32, #tpu.memory_space<vmem>>) attributes {dimension_semantics = [#tpu.dimension_semantics<parallel>, #tpu.dimension_semantics<parallel>], iteration_bounds = array<i64: 2, 1>, scalar_prefetch = 0 : i64, scratch_operands = 0 : i64, tpu.core_type = #tpu.core_type<tc>, window_params = [{transform_indices = @transform_0, window_bounds = array<i64: 1, 16, 32>}, {transform_indices = @transform_1, window_bounds = array<i64: 1, 32, 32>}, {transform_indices = @transform_2, window_bounds = array<i64: 1, 1, 32>}, {pipeline_mode = #tpu.pipeline_mode<synchronous>, transform_indices = @transform_3, window_bounds = array<i64: 32, 32>}, {pipeline_mode = #tpu.pipeline_mode<synchronous>, transform_indices = @transform_4, window_bounds = array<i64: 1, 32>}, {pipeline_mode = #tpu.pipeline_mode<synchronous>, transform_indices = @transform_5, window_bounds = array<i64: 1, 32>}, {pipeline_mode = #tpu.pipeline_mode<synchronous>, transform_indices = @transform_6, window_bounds = array<i64: 32, 32>}, {pipeline_mode = #tpu.pipeline_mode<synchronous>, transform_indices = @transform_7, window_bounds = array<i64: 1, 32>}, {pipeline_mode = #tpu.pipeline_mode<synchronous>, transform_indices = @transform_8, window_bounds = array<i64: 32, 32>}, {pipeline_mode = #tpu.pipeline_mode<synchronous>, transform_indices = @transform_9, window_bounds = array<i64: 1, 32>}, {pipeline_mode = #tpu.pipeline_mode<synchronous>, transform_indices = @transform_10, window_bounds = array<i64: 1, 32>}, {pipeline_mode = #tpu.pipeline_mode<synchronous>, transform_indices = @transform_11, window_bounds = array<i64: 1, 32>}, {pipeline_mode = #tpu.pipeline_mode<synchronous>, transform_indices = @transform_12, window_bounds = array<i64: 32, 128>}, {pipeline_mode = #tpu.pipeline_mode<synchronous>, transform_indices = @transform_13, window_bounds = array<i64: 128, 32>}, {transform_indices = @transform_14, window_bounds = array<i64: 1, 16, 32>}]} {
    %c0 = arith.constant 0 : index
    %c0_0 = arith.constant 0 : index
    %c0_1 = arith.constant 0 : index
    %0 = vector.load %arg2[%c0, %c0_0, %c0_1] : memref<1x16x32xf32, #tpu.memory_space<vmem>>, vector<1x16x32xf32>
    %1 = vector.shape_cast %0 : vector<1x16x32xf32> to vector<16x32xf32>
    %c0_2 = arith.constant 0 : index
    %c0_3 = arith.constant 0 : index
    %2 = vector.load %arg6[%c0_2, %c0_3] : memref<1x32xf32, #tpu.memory_space<vmem>>, vector<1x32xf32>
    %3 = vector.shape_cast %2 : vector<1x32xf32> to vector<32xf32>
    %c0_4 = arith.constant 0 : index
    %c0_5 = arith.constant 0 : index
    %4 = vector.load %arg7[%c0_4, %c0_5] : memref<1x32xf32, #tpu.memory_space<vmem>>, vector<1x32xf32>
    %5 = vector.shape_cast %4 : vector<1x32xf32> to vector<32xf32>
    %cst = arith.constant dense<0.000000e+00> : vector<16xf32>
    %6 = vector.multi_reduction <add>, %1, %cst [1] : vector<16x32xf32> to vector<16xf32>
    %7 = vector.shape_cast %6 : vector<16xf32> to vector<16x1xf32>
    %cst_6 = arith.constant 3.200000e+01 : f32
    %8 = vector.broadcast %cst_6 : f32 to vector<16x1xf32>
    %9 = arith.divf %7, %8 : vector<16x1xf32>
    %10 = vector.broadcast %9 : vector<16x1xf32> to vector<16x32xf32>
    %11 = arith.subf %1, %10 : vector<16x32xf32>
    %12 = arith.mulf %11, %11 : vector<16x32xf32>
    %cst_7 = arith.constant dense<0.000000e+00> : vector<16xf32>
    %13 = vector.multi_reduction <add>, %12, %cst_7 [1] : vector<16x32xf32> to vector<16xf32>
    %14 = vector.shape_cast %13 : vector<16xf32> to vector<16x1xf32>
    %cst_8 = arith.constant 3.200000e+01 : f32
    %15 = vector.broadcast %cst_8 : f32 to vector<16x1xf32>
    %16 = arith.divf %14, %15 : vector<16x1xf32>
    %17 = vector.broadcast %9 : vector<16x1xf32> to vector<16x32xf32>
    %18 = arith.subf %1, %17 : vector<16x32xf32>
    %cst_9 = arith.constant 9.99999974E-6 : f32
    %19 = vector.broadcast %cst_9 : f32 to vector<16x1xf32>
    %20 = arith.addf %16, %19 : vector<16x1xf32>
    %21 = math.rsqrt %20 : vector<16x1xf32>
    %22 = vector.broadcast %21 : vector<16x1xf32> to vector<16x32xf32>
    %23 = arith.mulf %18, %22 : vector<16x32xf32>
    %24 = vector.shape_cast %3 : vector<32xf32> to vector<1x32xf32>
    %25 = vector.broadcast %24 : vector<1x32xf32> to vector<16x32xf32>
    %26 = arith.mulf %23, %25 : vector<16x32xf32>
    %27 = vector.shape_cast %5 : vector<32xf32> to vector<1x32xf32>
    %28 = vector.broadcast %27 : vector<1x32xf32> to vector<16x32xf32>
    %29 = arith.addf %26, %28 : vector<16x32xf32>
    %30 = arith.truncf %29 : vector<16x32xf32> to vector<16x32xbf16>
    %c0_10 = arith.constant 0 : index
    %c0_11 = arith.constant 0 : index
    %31 = vector.load %arg8[%c0_10, %c0_11] : memref<32x32xbf16, #tpu.memory_space<vmem>>, vector<32x32xbf16>
    %cst_12 = arith.constant dense<0.000000e+00> : vector<16x32xf32>
    %32 = tpu.matmul %30, %31, %cst_12 {dimension_numbers = #tpu.dot_dimension_numbers<[1], [0], [0], [1], [0, 0, 1, 1], [], []>} : vector<16x32xbf16>, vector<32x32xbf16>, vector<16x32xf32> -> vector<16x32xf32>
    %c0_13 = arith.constant 0 : index
    %c0_14 = arith.constant 0 : index
    %33 = vector.load %arg9[%c0_13, %c0_14] : memref<1x32xf32, #tpu.memory_space<vmem>>, vector<1x32xf32>
    %34 = vector.shape_cast %33 : vector<1x32xf32> to vector<32xf32>
    %35 = vector.shape_cast %34 : vector<32xf32> to vector<1x32xf32>
    %36 = vector.broadcast %35 : vector<1x32xf32> to vector<16x32xf32>
    %37 = arith.addf %32, %36 : vector<16x32xf32>
    %cst_15 = arith.constant 0.000000e+00 : f32
    %38 = vector.broadcast %cst_15 : f32 to vector<16x32xf32>
    %39 = arith.cmpf ogt, %37, %38 : vector<16x32xf32>
    %cst_16 = arith.constant 1.000000e+00 : f32
    %40 = vector.broadcast %cst_16 : f32 to vector<16x32xf32>
    %41 = arith.addf %37, %40 : vector<16x32xf32>
    %42 = math.exp %37 : vector<16x32xf32>
    %43 = arith.select %39, %41, %42 : vector<16x32xi1>, vector<16x32xf32>
    %44 = arith.truncf %43 : vector<16x32xf32> to vector<16x32xbf16>
    %c0_17 = arith.constant 0 : index
    %c0_18 = arith.constant 0 : index
    %c0_19 = arith.constant 0 : index
    %45 = vector.load %arg3[%c0_17, %c0_18, %c0_19] : memref<1x32x32xbf16, #tpu.memory_space<vmem>>, vector<1x32x32xbf16>
    %46 = vector.shape_cast %45 : vector<1x32x32xbf16> to vector<32x32xbf16>
    %cst_20 = arith.constant dense<0.000000e+00> : vector<16x32xf32>
    %47 = tpu.matmul %44, %46, %cst_20 {dimension_numbers = #tpu.dot_dimension_numbers<[1], [0], [0], [1], [0, 0, 1, 1], [], []>} : vector<16x32xbf16>, vector<32x32xbf16>, vector<16x32xf32> -> vector<16x32xf32>
    %c0_21 = arith.constant 0 : index
    %c0_22 = arith.constant 0 : index
    %c0_23 = arith.constant 0 : index
    %48 = vector.load %arg4[%c0_21, %c0_22, %c0_23] : memref<1x1x32xf32, #tpu.memory_space<vmem>>, vector<1x1x32xf32>
    %49 = vector.shape_cast %48 : vector<1x1x32xf32> to vector<1x32xf32>
    %50 = vector.broadcast %49 : vector<1x32xf32> to vector<16x32xf32>
    %51 = arith.mulf %43, %50 : vector<16x32xf32>
    %52 = arith.truncf %51 : vector<16x32xf32> to vector<16x32xbf16>
    %c0_24 = arith.constant 0 : index
    %c0_25 = arith.constant 0 : index
    %53 = vector.load %arg5[%c0_24, %c0_25] : memref<32x32xbf16, #tpu.memory_space<vmem>>, vector<32x32xbf16>
    %cst_26 = arith.constant dense<0.000000e+00> : vector<16x32xf32>
    %54 = tpu.matmul %52, %53, %cst_26 {dimension_numbers = #tpu.dot_dimension_numbers<[1], [0], [0], [1], [0, 0, 1, 1], [], []>} : vector<16x32xbf16>, vector<32x32xbf16>, vector<16x32xf32> -> vector<16x32xf32>
    %cst_27 = arith.constant 9.99999997E-7 : f32
    %55 = vector.broadcast %cst_27 : f32 to vector<16x32xf32>
    %56 = arith.addf %54, %55 : vector<16x32xf32>
    %57 = arith.divf %47, %56 : vector<16x32xf32>
    %58 = arith.truncf %57 : vector<16x32xf32> to vector<16x32xbf16>
    %c0_28 = arith.constant 0 : index
    %c0_29 = arith.constant 0 : index
    %59 = vector.load %arg10[%c0_28, %c0_29] : memref<32x32xbf16, #tpu.memory_space<vmem>>, vector<32x32xbf16>
    %cst_30 = arith.constant dense<0.000000e+00> : vector<16x32xf32>
    %60 = tpu.matmul %58, %59, %cst_30 {dimension_numbers = #tpu.dot_dimension_numbers<[1], [0], [0], [1], [0, 0, 1, 1], [], []>} : vector<16x32xbf16>, vector<32x32xbf16>, vector<16x32xf32> -> vector<16x32xf32>
    %c0_31 = arith.constant 0 : index
    %c0_32 = arith.constant 0 : index
    %61 = vector.load %arg11[%c0_31, %c0_32] : memref<1x32xf32, #tpu.memory_space<vmem>>, vector<1x32xf32>
    %62 = vector.shape_cast %61 : vector<1x32xf32> to vector<32xf32>
    %63 = vector.shape_cast %62 : vector<32xf32> to vector<1x32xf32>
    %64 = vector.broadcast %63 : vector<1x32xf32> to vector<16x32xf32>
    %65 = arith.addf %60, %64 : vector<16x32xf32>
    %66 = arith.addf %1, %65 : vector<16x32xf32>
    %c0_33 = arith.constant 0 : index
    %c0_34 = arith.constant 0 : index
    %67 = vector.load %arg12[%c0_33, %c0_34] : memref<1x32xf32, #tpu.memory_space<vmem>>, vector<1x32xf32>
    %68 = vector.shape_cast %67 : vector<1x32xf32> to vector<32xf32>
    %c0_35 = arith.constant 0 : index
    %c0_36 = arith.constant 0 : index
    %69 = vector.load %arg13[%c0_35, %c0_36] : memref<1x32xf32, #tpu.memory_space<vmem>>, vector<1x32xf32>
    %70 = vector.shape_cast %69 : vector<1x32xf32> to vector<32xf32>
    %cst_37 = arith.constant dense<0.000000e+00> : vector<16xf32>
    %71 = vector.multi_reduction <add>, %66, %cst_37 [1] : vector<16x32xf32> to vector<16xf32>
    %72 = vector.shape_cast %71 : vector<16xf32> to vector<16x1xf32>
    %cst_38 = arith.constant 3.200000e+01 : f32
    %73 = vector.broadcast %cst_38 : f32 to vector<16x1xf32>
    %74 = arith.divf %72, %73 : vector<16x1xf32>
    %75 = vector.broadcast %74 : vector<16x1xf32> to vector<16x32xf32>
    %76 = arith.subf %66, %75 : vector<16x32xf32>
    %77 = arith.mulf %76, %76 : vector<16x32xf32>
    %cst_39 = arith.constant dense<0.000000e+00> : vector<16xf32>
    %78 = vector.multi_reduction <add>, %77, %cst_39 [1] : vector<16x32xf32> to vector<16xf32>
    %79 = vector.shape_cast %78 : vector<16xf32> to vector<16x1xf32>
    %cst_40 = arith.constant 3.200000e+01 : f32
    %80 = vector.broadcast %cst_40 : f32 to vector<16x1xf32>
    %81 = arith.divf %79, %80 : vector<16x1xf32>
    %82 = vector.broadcast %74 : vector<16x1xf32> to vector<16x32xf32>
    %83 = arith.subf %66, %82 : vector<16x32xf32>
    %cst_41 = arith.constant 9.99999974E-6 : f32
    %84 = vector.broadcast %cst_41 : f32 to vector<16x1xf32>
    %85 = arith.addf %81, %84 : vector<16x1xf32>
    %86 = math.rsqrt %85 : vector<16x1xf32>
    %87 = vector.broadcast %86 : vector<16x1xf32> to vector<16x32xf32>
    %88 = arith.mulf %83, %87 : vector<16x32xf32>
    %89 = vector.shape_cast %68 : vector<32xf32> to vector<1x32xf32>
    %90 = vector.broadcast %89 : vector<1x32xf32> to vector<16x32xf32>
    %91 = arith.mulf %88, %90 : vector<16x32xf32>
    %92 = vector.shape_cast %70 : vector<32xf32> to vector<1x32xf32>
    %93 = vector.broadcast %92 : vector<1x32xf32> to vector<16x32xf32>
    %94 = arith.addf %91, %93 : vector<16x32xf32>
    %95 = arith.truncf %94 : vector<16x32xf32> to vector<16x32xbf16>
    %c0_42 = arith.constant 0 : index
    %c0_43 = arith.constant 0 : index
    %96 = vector.load %arg14[%c0_42, %c0_43] : memref<32x128xbf16, #tpu.memory_space<vmem>>, vector<32x128xbf16>
    %cst_44 = arith.constant dense<0.000000e+00> : vector<16x128xf32>
    %97 = tpu.matmul %95, %96, %cst_44 {dimension_numbers = #tpu.dot_dimension_numbers<[1], [0], [0], [1], [0, 0, 1, 1], [], []>} : vector<16x32xbf16>, vector<32x128xbf16>, vector<16x128xf32> -> vector<16x128xf32>
    %cst_45 = arith.constant 5.000000e-01 : f32
    %98 = vector.broadcast %cst_45 : f32 to vector<16x128xf32>
    %99 = arith.mulf %98, %97 : vector<16x128xf32>
    %cst_46 = arith.constant 0.707106769 : f32
    %100 = vector.broadcast %cst_46 : f32 to vector<16x128xf32>
    %101 = arith.mulf %97, %100 : vector<16x128xf32>
    %102 = math.erf %101 : vector<16x128xf32>
    %cst_47 = arith.constant 1.000000e+00 : f32
    %103 = vector.broadcast %cst_47 : f32 to vector<16x128xf32>
    %104 = arith.addf %103, %102 : vector<16x128xf32>
    %105 = arith.mulf %99, %104 : vector<16x128xf32>
    %106 = arith.truncf %105 : vector<16x128xf32> to vector<16x128xbf16>
    %c0_48 = arith.constant 0 : index
    %c0_49 = arith.constant 0 : index
    %107 = vector.load %arg15[%c0_48, %c0_49] : memref<128x32xbf16, #tpu.memory_space<vmem>>, vector<128x32xbf16>
    %cst_50 = arith.constant dense<0.000000e+00> : vector<16x32xf32>
    %108 = tpu.matmul %106, %107, %cst_50 {dimension_numbers = #tpu.dot_dimension_numbers<[1], [0], [0], [1], [0, 0, 1, 1], [], []>} : vector<16x128xbf16>, vector<128x32xbf16>, vector<16x32xf32> -> vector<16x32xf32>
    %109 = arith.addf %66, %108 : vector<16x32xf32>
    %c0_51 = arith.constant 0 : index
    %c0_52 = arith.constant 0 : index
    %c0_53 = arith.constant 0 : index
    %110 = vector.load %arg16[%c0_51, %c0_52, %c0_53] : memref<1x16x32xf32, #tpu.memory_space<vmem>>, vector<1x16x32xf32>
    %111 = vector.shape_cast %110 : vector<1x16x32xf32> to vector<16x32xf32>
    %112 = vector.shape_cast %109 : vector<16x32xf32> to vector<1x16x32xf32>
    tpu.vector_store %arg16[%c0_51, %c0_52, %c0_53], %112 {strides = array<i32>} : memref<1x16x32xf32, #tpu.memory_space<vmem>>, vector<1x16x32xf32>,
    return
  }
  func.func @transform_0(%arg0: i32, %arg1: i32) -> (i32, i32, i32) {
    %c0_i32 = arith.constant 0 : i32
    %c0_i32_0 = arith.constant 0 : i32
    return %arg0, %arg1, %c0_i32 : i32, i32, i32
  }
  func.func @transform_1(%arg0: i32, %arg1: i32) -> (i32, i32, i32) {
    %c0_i32 = arith.constant 0 : i32
    %c0_i32_0 = arith.constant 0 : i32
    %c0_i32_1 = arith.constant 0 : i32
    return %arg0, %c0_i32, %c0_i32_0 : i32, i32, i32
  }
  func.func @transform_2(%arg0: i32, %arg1: i32) -> (i32, i32, i32) {
    %c0_i32 = arith.constant 0 : i32
    %c0_i32_0 = arith.constant 0 : i32
    %c0_i32_1 = arith.constant 0 : i32
    return %arg0, %c0_i32, %c0_i32_0 : i32, i32, i32
  }
  func.func @transform_3(%arg0: i32, %arg1: i32) -> (i32, i32) {
    %c0_i32 = arith.constant 0 : i32
    %c0_i32_0 = arith.constant 0 : i32
    %c0_i32_1 = arith.constant 0 : i32
    return %c0_i32, %c0_i32_0 : i32, i32
  }
  func.func @transform_4(%arg0: i32, %arg1: i32) -> (i32, i32) {
    %c0_i32 = arith.constant 0 : i32
    %c0_i32_0 = arith.constant 0 : i32
    %c0_i32_1 = arith.constant 0 : i32
    return %c0_i32, %c0_i32_0 : i32, i32
  }
  func.func @transform_5(%arg0: i32, %arg1: i32) -> (i32, i32) {
    %c0_i32 = arith.constant 0 : i32
    %c0_i32_0 = arith.constant 0 : i32
    %c0_i32_1 = arith.constant 0 : i32
    return %c0_i32, %c0_i32_0 : i32, i32
  }
  func.func @transform_6(%arg0: i32, %arg1: i32) -> (i32, i32) {
    %c0_i32 = arith.constant 0 : i32
    %c0_i32_0 = arith.constant 0 : i32
    %c0_i32_1 = arith.constant 0 : i32
    return %c0_i32, %c0_i32_0 : i32, i32
  }
  func.func @transform_7(%arg0: i32, %arg1: i32) -> (i32, i32) {
    %c0_i32 = arith.constant 0 : i32
    %c0_i32_0 = arith.constant 0 : i32
    %c0_i32_1 = arith.constant 0 : i32
    return %c0_i32, %c0_i32_0 : i32, i32
  }
  func.func @transform_8(%arg0: i32, %arg1: i32) -> (i32, i32) {
    %c0_i32 = arith.constant 0 : i32
    %c0_i32_0 = arith.constant 0 : i32
    %c0_i32_1 = arith.constant 0 : i32
    return %c0_i32, %c0_i32_0 : i32, i32
  }
  func.func @transform_9(%arg0: i32, %arg1: i32) -> (i32, i32) {
    %c0_i32 = arith.constant 0 : i32
    %c0_i32_0 = arith.constant 0 : i32
    %c0_i32_1 = arith.constant 0 : i32
    return %c0_i32, %c0_i32_0 : i32, i32
  }
  func.func @transform_10(%arg0: i32, %arg1: i32) -> (i32, i32) {
    %c0_i32 = arith.constant 0 : i32
    %c0_i32_0 = arith.constant 0 : i32
    %c0_i32_1 = arith.constant 0 : i32
    return %c0_i32, %c0_i32_0 : i32, i32
  }
  func.func @transform_11(%arg0: i32, %arg1: i32) -> (i32, i32) {
    %c0_i32 = arith.constant 0 : i32
    %c0_i32_0 = arith.constant 0 : i32
    %c0_i32_1 = arith.constant 0 : i32
    return %c0_i32, %c0_i32_0 : i32, i32
  }
  func.func @transform_12(%arg0: i32, %arg1: i32) -> (i32, i32) {
    %c0_i32 = arith.constant 0 : i32
    %c0_i32_0 = arith.constant 0 : i32
    %c0_i32_1 = arith.constant 0 : i32
    return %c0_i32, %c0_i32_0 : i32, i32
  }
  func.func @transform_13(%arg0: i32, %arg1: i32) -> (i32, i32) {
    %c0_i32 = arith.constant 0 : i32
    %c0_i32_0 = arith.constant 0 : i32
    %c0_i32_1 = arith.constant 0 : i32
    return %c0_i32, %c0_i32_0 : i32, i32
  }
  func.func @transform_14(%arg0: i32, %arg1: i32) -> (i32, i32, i32) {
    %c0_i32 = arith.constant 0 : i32
    %c0_i32_0 = arith.constant 0 : i32
    return %arg0, %arg1, %c0_i32 : i32, i32, i32
  }
}

</mosaic_0001>

<llo_original>
// kernel: decoder_vit_block.2
$region0: #{decoder_vit_block.2}
  #allocation0 [shape = 'u32[]', space=smem, size = 0x4, offset = 0x4, fixed_abs, tag = 'smem constant byte address 0x4 - core index']
  #allocation1 [shape = 'u32[144,128]{1,0:T(1,128)}', space=vmem, size = 0x12000, scoped, tag = 'internal scratch']
  #allocation2 [shape = 'f32[32,32]{1,0:T(8,128)}', space=vmem, size = 0x4000, scoped, tag = 'scratch operand']
  #allocation3 [shape = 'f32[1,32]{1,0:T(1,128)}', space=vmem, size = 0x200, scoped, tag = 'scratch operand']
  %s0 = inlined_call_operand.vmem [shape: f32[2,16,32], index: 0, kind: input, shape index: {}]
  %s1 = inlined_call_operand.vmem [shape: f32[1,32], index: 1, kind: input, shape index: {}]
  %s2 = inlined_call_operand.vmem [shape: f32[1,32], index: 2, kind: input, shape index: {}]
  %s3 = inlined_call_operand.hbm [shape: bf16[32,32], index: 3, kind: input, shape index: {}]
  %s4 = inlined_call_operand.hbm [shape: f32[1,32], index: 4, kind: input, shape index: {}]
  %s5 = inlined_call_operand.hbm [shape: bf16[32,32], index: 5, kind: input, shape index: {}]
  %s6 = inlined_call_operand.hbm [shape: f32[1,32], index: 6, kind: input, shape index: {}]
  %s7 = inlined_call_operand.vmem [shape: bf16[32,32], index: 7, kind: input, shape index: {}]
  %s8 = inlined_call_operand.vmem [shape: bf16[2,32,32], index: 8, kind: output, shape index: {0}]
  %s9 = inlined_call_operand.vmem [shape: f32[2,1,32], index: 9, kind: output, shape index: {1}]
  %10 = xla_tuple %s8, %s9
  %s11 = sld [smem:[#allocation0]]
  $region97: #{decoder_vit_block.2} parent=0
    _
  %s13 = ssub.s32 1, %s11
  %s14 = scalar_select 0, %s13, %s11
  $region1: #{decoder_vit_block.2} parent=0
    #allocation4 [shape = 'u8[8192]{0}', space=vmem, size = 0x2000, scoped, tag = 'input window, operand 3, single buffered']
    #allocation5 [shape = 's32[2]{0}', space=sflag, size = 0x8, scoped, tag = 'scoped memory for decoder_vit_block.2']
    #allocation6 [shape = 'u8[512]{0}', space=vmem, size = 0x400, scoped, tag = 'input window, operand 4, single buffered']
    #allocation7 [shape = 's32[1]{0}', space=sflag, size = 0x4, scoped, tag = 'scoped memory for decoder_vit_block.2']
    #allocation8 [shape = 'u8[8192]{0}', space=vmem, size = 0x2000, scoped, tag = 'input window, operand 5, single buffered']
    #allocation9 [shape = 'u8[512]{0}', space=vmem, size = 0x400, scoped, tag = 'input window, operand 6, single buffered']
    #allocation10 [shape = 's32[1]{0}', space=sflag, size = 0x4, scoped, tag = 'scoped memory for decoder_vit_block.2']
    %15 = vsyncpa [#allocation5], 0
    %16 = vsyncpa [#allocation7], 0
    %17 = vsyncpa [#allocation10], 0
    loop: start=0, step=1, limit=4
    $region2: #{decoder_vit_block.2} parent=1 // loop_pre_header
      _
    $region3: #{decoder_vit_block.2} parent=1 // loop_header
      %s19 = sphi 0, %s23
      %p20 = scmp.ge.s32.totalorder %s19, 4
      %s26 = sphi 0, %s38
      %s27 = sphi 0, %s34
      %s28 = sphi 0, %s26
      %s29 = sphi 0, %s27
      %s30 = sphi 0, %s28
      %s31 = sphi 0, %s29
      %s43 = sphi 0, %s45
      %s46 = sphi 0, %s43
      %s47 = sphi 0, %s46
      %s63 = sphi 0, %s47
      %s67 = sphi 0, %s67
      %s69 = sphi 0, %s67
      %s70 = sphi 0, %s69
      %s84 = sphi 0, %s70
      %s88 = sphi 0, %s88
      %s90 = sphi 0, %s88
      %s91 = sphi 0, %s90
      %s105 = sphi 0, %s91
      %s109 = sphi 0, %s109
      %s111 = sphi 0, %s109
      %s112 = sphi 0, %s111
      %s126 = sphi 0, %s112
      %s130 = sphi 0, %s130
      %s132 = sphi 0, %s130
      %s133 = sphi 0, %s132
      %s147 = sphi 0, %s133
      %s151 = sphi 0, %s151
      %s153 = sphi 0, %s151
      %s154 = sphi 0, %s153
      %s168 = sphi 0, %s154
      %s172 = sphi 0, %s172
      %s174 = sphi 0, %s172
      %s175 = sphi 0, %s174
      %s189 = sphi 0, %s175
      %s193 = sphi 0, %s193
      %s195 = sphi 0, %s193
      %s196 = sphi 0, %s195
      %s210 = sphi 0, %s196
      %s216 = sphi 0, %s218
      %s219 = sphi 0, %s216
      %s220 = sphi 0, %s219
      %s236 = sphi 0, %s220
      %s242 = sphi 0, %s244
      %s245 = sphi 0, %s242
      %s246 = sphi 0, %s245
      %s262 = sphi 0, %s246
    $region4: #{decoder_vit_block.2} parent=1 // loop_header_branch
      %22 = sbr.rel (%p20) target = $region8
    $region5: #{decoder_vit_block.2} parent=1 // loop_body
      %s24 = ssub.s32 %s19, 1
      %s25 = ssub.s32 %s19, 2
      %s32 = sadd.s32 1, %s27
      %p33 = scmp.ge.s32.totalorder %s32, 1
      %s34 = scalar_select %p33, 0, %s32
      %s35 = sadd.s32 1, %s26
      %s36 = scalar_select %p33, %s35, %s26
      %p37 = scmp.ge.s32.totalorder %s36, 2
      %s38 = scalar_select %p37, 0, %s36
      %s39 = ssub.s32 %s26, %s38
      %s40 = ssub.s32 %s27, %s34
      %s41 = sor.u32 %s39, %s40
      %p42 = scmp.eq.s32.totalorder %s41, 0
      %s44 = sadd.s32 %s43, 1
      %s45 = scalar_select %p42, %s43, %s44
      %p48 = pneg %p42
      %p49 = scmp.eq.s32.totalorder %s19, 1
      %p50 = por %p48, %p49
      %p51 = scmp.ne.s32.totalorder %s43, %s46
      %p52 = scmp.eq.s32.totalorder %s19, 0
      %p53 = por %p51, %p52
      %p54 = scmp.ne.s32.totalorder %s43, %s46
      %p55 = scmp.eq.s32.totalorder %s24, 1
      %p56 = por %p54, %p55
      %p57 = scmp.ne.s32.totalorder %s46, %s47
      %p58 = scmp.eq.s32.totalorder %s24, 0
      %p59 = por %p57, %p58
      %p60 = scmp.ne.s32.totalorder %s46, %s47
      %p61 = scmp.eq.s32.totalorder %s25, 1
      %p62 = por %p60, %p61
      %p64 = scmp.ne.s32.totalorder %s47, %s63
      %p65 = scmp.eq.s32.totalorder %s25, 0
      %p66 = por %p64, %p65
      %s68 = sadd.s32 %s67, 1
      %p71 = scmp.eq.s32.totalorder %s19, 1
      %p72 = scmp.ne.s32.totalorder %s67, %s69
      %p73 = scmp.eq.s32.totalorder %s19, 0
      %p74 = por %p72, %p73
      %p75 = scmp.ne.s32.totalorder %s67, %s69
      %p76 = scmp.eq.s32.totalorder %s24, 1
      %p77 = por %p75, %p76
      %p78 = scmp.ne.s32.totalorder %s69, %s70
      %p79 = scmp.eq.s32.totalorder %s24, 0
      %p80 = por %p78, %p79
      %p81 = scmp.ne.s32.totalorder %s69, %s70
      %p82 = scmp.eq.s32.totalorder %s25, 1
      %p83 = por %p81, %p82
      %p85 = scmp.ne.s32.totalorder %s70, %s84
      %p86 = scmp.eq.s32.totalorder %s25, 0
      %p87 = por %p85, %p86
      %s89 = sadd.s32 %s88, 1
      %p92 = scmp.eq.s32.totalorder %s19, 1
      %p93 = scmp.ne.s32.totalorder %s88, %s90
      %p94 = scmp.eq.s32.totalorder %s19, 0
      %p95 = por %p93, %p94
      %p96 = scmp.ne.s32.totalorder %s88, %s90
      %p97 = scmp.eq.s32.totalorder %s24, 1
      %p98 = por %p96, %p97
      %p99 = scmp.ne.s32.totalorder %s90, %s91
      %p100 = scmp.eq.s32.totalorder %s24, 0
      %p101 = por %p99, %p100
      %p102 = scmp.ne.s32.totalorder %s90, %s91
      %p103 = scmp.eq.s32.totalorder %s25, 1
      %p104 = por %p102, %p103
      %p106 = scmp.ne.s32.totalorder %s91, %s105
      %p107 = scmp.eq.s32.totalorder %s25, 0
      %p108 = por %p106, %p107
      %s110 = sadd.s32 %s109, 1
      %p113 = scmp.eq.s32.totalorder %s19, 1
      %p114 = scmp.ne.s32.totalorder %s109, %s111
      %p115 = scmp.eq.s32.totalorder %s19, 0
      %p116 = por %p114, %p115
      %p117 = scmp.ne.s32.totalorder %s109, %s111
      %p118 = scmp.eq.s32.totalorder %s24, 1
      %p119 = por %p117, %p118
      %p120 = scmp.ne.s32.totalorder %s111, %s112
      %p121 = scmp.eq.s32.totalorder %s24, 0
      %p122 = por %p120, %p121
      %p123 = scmp.ne.s32.totalorder %s111, %s112
      %p124 = scmp.eq.s32.totalorder %s25, 1
      %p125 = por %p123, %p124
      %p127 = scmp.ne.s32.totalorder %s112, %s126
      %p128 = scmp.eq.s32.totalorder %s25, 0
      %p129 = por %p127, %p128
      %s131 = sadd.s32 %s130, 1
      %p134 = scmp.eq.s32.totalorder %s19, 1
      %p135 = scmp.ne.s32.totalorder %s130, %s132
      %p136 = scmp.eq.s32.totalorder %s19, 0
      %p137 = por %p135, %p136
      %p138 = scmp.ne.s32.totalorder %s130, %s132
      %p139 = scmp.eq.s32.totalorder %s24, 1
      %p140 = por %p138, %p139
      %p141 = scmp.ne.s32.totalorder %s132, %s133
      %p142 = scmp.eq.s32.totalorder %s24, 0
      %p143 = por %p141, %p142
      %p144 = scmp.ne.s32.totalorder %s132, %s133
      %p145 = scmp.eq.s32.totalorder %s25, 1
      %p146 = por %p144, %p145
      %p148 = scmp.ne.s32.totalorder %s133, %s147
      %p149 = scmp.eq.s32.totalorder %s25, 0
      %p150 = por %p148, %p149
      %s152 = sadd.s32 %s151, 1
      %p155 = scmp.eq.s32.totalorder %s19, 1
      %p156 = scmp.ne.s32.totalorder %s151, %s153
      %p157 = scmp.eq.s32.totalorder %s19, 0
      %p158 = por %p156, %p157
      %p159 = scmp.ne.s32.totalorder %s151, %s153
      %p160 = scmp.eq.s32.totalorder %s24, 1
      %p161 = por %p159, %p160
      %p162 = scmp.ne.s32.totalorder %s153, %s154
      %p163 = scmp.eq.s32.totalorder %s24, 0
      %p164 = por %p162, %p163
      %p165 = scmp.ne.s32.totalorder %s153, %s154
      %p166 = scmp.eq.s32.totalorder %s25, 1
      %p167 = por %p165, %p166
      %p169 = scmp.ne.s32.totalorder %s154, %s168
      %p170 = scmp.eq.s32.totalorder %s25, 0
      %p171 = por %p169, %p170
      %s173 = sadd.s32 %s172, 1
      %p176 = scmp.eq.s32.totalorder %s19, 1
      %p177 = scmp.ne.s32.totalorder %s172, %s174
      %p178 = scmp.eq.s32.totalorder %s19, 0
      %p179 = por %p177, %p178
      %p180 = scmp.ne.s32.totalorder %s172, %s174
      %p181 = scmp.eq.s32.totalorder %s24, 1
      %p182 = por %p180, %p181
      %p183 = scmp.ne.s32.totalorder %s174, %s175
      %p184 = scmp.eq.s32.totalorder %s24, 0
      %p185 = por %p183, %p184
      %p186 = scmp.ne.s32.totalorder %s174, %s175
      %p187 = scmp.eq.s32.totalorder %s25, 1
      %p188 = por %p186, %p187
      %p190 = scmp.ne.s32.totalorder %s175, %s189
      %p191 = scmp.eq.s32.totalorder %s25, 0
      %p192 = por %p190, %p191
      %s194 = sadd.s32 %s193, 1
      %p197 = scmp.eq.s32.totalorder %s19, 1
      %p198 = scmp.ne.s32.totalorder %s193, %s195
      %p199 = scmp.eq.s32.totalorder %s19, 0
      %p200 = por %p198, %p199
      %p201 = scmp.ne.s32.totalorder %s193, %s195
      %p202 = scmp.eq.s32.totalorder %s24, 1
      %p203 = por %p201, %p202
      %p204 = scmp.ne.s32.totalorder %s195, %s196
      %p205 = scmp.eq.s32.totalorder %s24, 0
      %p206 = por %p204, %p205
      %p207 = scmp.ne.s32.totalorder %s195, %s196
      %p208 = scmp.eq.s32.totalorder %s25, 1
      %p209 = por %p207, %p208
      %p211 = scmp.ne.s32.totalorder %s196, %s210
      %p212 = scmp.eq.s32.totalorder %s25, 0
      %p213 = por %p211, %p212
      %s214 = ssub.s32 %s26, %s38
      %p215 = scmp.eq.s32.totalorder %s214, 0
      %s217 = sadd.s32 %s216, 1
      %s218 = scalar_select %p215, %s216, %s217
      %p221 = pneg %p215
      %p222 = scmp.eq.s32.totalorder %s19, 1
      %p223 = por %p221, %p222
      %p224 = scmp.ne.s32.totalorder %s216, %s219
      %p225 = scmp.eq.s32.totalorder %s19, 0
      %p226 = por %p224, %p225
      %p227 = scmp.ne.s32.totalorder %s216, %s219
      %p228 = scmp.eq.s32.totalorder %s24, 1
      %p229 = por %p227, %p228
      %p230 = scmp.ne.s32.totalorder %s219, %s220
      %p231 = scmp.eq.s32.totalorder %s24, 0
      %p232 = por %p230, %p231
      %p233 = scmp.ne.s32.totalorder %s219, %s220
      %p234 = scmp.eq.s32.totalorder %s25, 1
      %p235 = por %p233, %p234
      %p237 = scmp.ne.s32.totalorder %s220, %s236
      %p238 = scmp.eq.s32.totalorder %s25, 0
      %p239 = por %p237, %p238
      %s240 = ssub.s32 %s26, %s38
      %p241 = scmp.eq.s32.totalorder %s240, 0
      %s243 = sadd.s32 %s242, 1
      %s244 = scalar_select %p241, %s242, %s243
      %p247 = pneg %p241
      %p248 = scmp.eq.s32.totalorder %s19, 1
      %p249 = por %p247, %p248
      %p250 = scmp.ne.s32.totalorder %s242, %s245
      %p251 = scmp.eq.s32.totalorder %s19, 0
      %p252 = por %p250, %p251
      %p253 = scmp.ne.s32.totalorder %s242, %s245
      %p254 = scmp.eq.s32.totalorder %s24, 1
      %p255 = por %p253, %p254
      %p256 = scmp.ne.s32.totalorder %s245, %s246
      %p257 = scmp.eq.s32.totalorder %s24, 0
      %p258 = por %p256, %p257
      %p259 = scmp.ne.s32.totalorder %s245, %s246
      %p260 = scmp.eq.s32.totalorder %s25, 1
      %p261 = por %p259, %p260
      %p263 = scmp.ne.s32.totalorder %s246, %s262
      %p264 = scmp.eq.s32.totalorder %s25, 0
      %p265 = por %p263, %p264
      %p266 = scmp.le.s32.totalorder 1, %s19
      %p267 = scmp.lt.s32.totalorder %s19, 3
      %p268 = pnand %p266, %p267
      %p269 = pneg %p268
      // Predicated region
      $region9: #{decoder_vit_block.2} parent=5 // pred_check
        _
      $region10: #{decoder_vit_block.2} parent=5 // pred_check_branch
        %271 = sbr.rel (%p268) target = $region12
      $region11: #{decoder_vit_block.2} parent=5 // pred_region
        %s272 = ssub.s32 %s19, 1
        // Predicated region
        $region13: #{decoder_vit_block.2} parent=11 // pred_check
          %p273 = pneg %p80
        $region14: #{decoder_vit_block.2} parent=11 // pred_check_branch
          %275 = sbr.rel (%p273) target = $region16
        $region15: #{decoder_vit_block.2} parent=11 // pred_region
          _
        $region16: #{decoder_vit_block.2} parent=11 // pred_fallthru
          _
        // Predicated region
        $region17: #{decoder_vit_block.2} parent=11 // pred_check
          %p276 = pneg %p101
        $region18: #{decoder_vit_block.2} parent=11 // pred_check_branch
          %278 = sbr.rel (%p276) target = $region20
        $region19: #{decoder_vit_block.2} parent=11 // pred_region
          _
        $region20: #{decoder_vit_block.2} parent=11 // pred_fallthru
          _
        // Predicated region
        $region21: #{decoder_vit_block.2} parent=11 // pred_check
          %p279 = pneg %p122
        $region22: #{decoder_vit_block.2} parent=11 // pred_check_branch
          %281 = sbr.rel (%p279) target = $region24
        $region23: #{decoder_vit_block.2} parent=11 // pred_region
          %s283 = ssub.s32 256, 256
          %284 = vsyncadd [#allocation5], %s283
          %s285 = sshll.u32 [#allocation4], 4
          %s286 = int_to_ptr.vmem [resolvable:$true] %s285
          %291 = dma.hbm_to_vmem [thread:$0]  %s3, 256, %s286, [#allocation5], 64, 64, 4
        $region24: #{decoder_vit_block.2} parent=11 // pred_fallthru
          _
        // Predicated region
        $region25: #{decoder_vit_block.2} parent=11 // pred_check
          %p292 = pneg %p143
        $region26: #{decoder_vit_block.2} parent=11 // pred_check_branch
          %294 = sbr.rel (%p292) target = $region28
        $region27: #{decoder_vit_block.2} parent=11 // pred_region
          %s296 = ssub.s32 16, 16
          %297 = vsyncadd [#allocation7], %s296
          %s299 = sshll.u32 [#allocation6], 4
          %s300 = int_to_ptr.vmem [resolvable:$true] %s299
          %302 = dma.hbm_to_vmem [thread:$0]  %s4, 16, %s300, [#allocation7]
        $region28: #{decoder_vit_block.2} parent=11 // pred_fallthru
          _
        // Predicated region
        $region29: #{decoder_vit_block.2} parent=11 // pred_check
          %p303 = pneg %p164
        $region30: #{decoder_vit_block.2} parent=11 // pred_check_branch
          %305 = sbr.rel (%p303) target = $region32
        $region31: #{decoder_vit_block.2} parent=11 // pred_region
          %s307 = ssub.s32 256, 256
          %308 = vsyncadd [#allocation7], %s307
          %s309 = sshll.u32 [#allocation8], 4
          %s310 = int_to_ptr.vmem [resolvable:$true] %s309
          %315 = dma.hbm_to_vmem [thread:$0]  %s5, 256, %s310, [#allocation7], 64, 64, 4
        $region32: #{decoder_vit_block.2} parent=11 // pred_fallthru
          _
        // Predicated region
        $region33: #{decoder_vit_block.2} parent=11 // pred_check
          %p316 = pneg %p185
        $region34: #{decoder_vit_block.2} parent=11 // pred_check_branch
          %318 = sbr.rel (%p316) target = $region36
        $region35: #{decoder_vit_block.2} parent=11 // pred_region
          %s320 = ssub.s32 16, 16
          %321 = vsyncadd [#allocation10], %s320
          %s323 = sshll.u32 [#allocation9], 4
          %s324 = int_to_ptr.vmem [resolvable:$true] %s323
          %326 = dma.hbm_to_vmem [thread:$0]  %s6, 16, %s324, [#allocation10]
        $region36: #{decoder_vit_block.2} parent=11 // pred_fallthru
          _
        // Predicated region
        $region37: #{decoder_vit_block.2} parent=11 // pred_check
          %p327 = pneg %p206
        $region38: #{decoder_vit_block.2} parent=11 // pred_check_branch
          %329 = sbr.rel (%p327) target = $region40
        $region39: #{decoder_vit_block.2} parent=11 // pred_region
          _
        $region40: #{decoder_vit_block.2} parent=11 // pred_fallthru
          _
      $region12: #{decoder_vit_block.2} parent=5 // pred_fallthru
        _
      %p330 = scmp.lt.s32.totalorder %s19, 2
      // Predicated region
      $region41: #{decoder_vit_block.2} parent=5 // pred_check
        %p331 = pneg %p330
      $region42: #{decoder_vit_block.2} parent=5 // pred_check_branch
        %333 = sbr.rel (%p331) target = $region44
      $region43: #{decoder_vit_block.2} parent=5 // pred_region
        // Predicated region
        $region45: #{decoder_vit_block.2} parent=43 // pred_check
          %p334 = pneg %p53
        $region46: #{decoder_vit_block.2} parent=43 // pred_check_branch
          %336 = sbr.rel (%p334) target = $region48
        $region47: #{decoder_vit_block.2} parent=43 // pred_region
          %s337 = smul.u32 2, %s27
          %p338 = scmp.lt.s32.totalorder %s26, 1
          %s339 = scalar_select %p338, %s26, 1
          %p340 = scmp.lt.s32.totalorder %s337, 1
          %s341 = scalar_select %p340, %s337, 1
          %s342 = smul.addr %s339, 2
          %s343 = sadd.s32 %s341, %s342
          %s344 = smul.addr %s343, 8
          %s345 = scalar_lea.vmem %s0, %s344
          %s346 = smul.u32 2, %s27
        $region48: #{decoder_vit_block.2} parent=43 // pred_fallthru
          _
      $region44: #{decoder_vit_block.2} parent=5 // pred_fallthru
        _
      %p347 = scmp.le.s32.totalorder 1, %s19
      %p348 = scmp.lt.s32.totalorder %s19, 3
      %p349 = pnand %p347, %p348
      %p350 = pneg %p349
      // Predicated region
      $region49: #{decoder_vit_block.2} parent=5 // pred_check
        _
      $region50: #{decoder_vit_block.2} parent=5 // pred_check_branch
        %352 = sbr.rel (%p349) target = $region52
      $region51: #{decoder_vit_block.2} parent=5 // pred_region
        %s353 = ssub.s32 %s19, 1
        // Predicated region
        $region53: #{decoder_vit_block.2} parent=51 // pred_check
          %p354 = pneg %p122
        $region54: #{decoder_vit_block.2} parent=51 // pred_check_branch
          %356 = sbr.rel (%p354) target = $region56
        $region55: #{decoder_vit_block.2} parent=51 // pred_region
          %357 = dma.done [#allocation5], 256
        $region56: #{decoder_vit_block.2} parent=51 // pred_fallthru
          _
        // Predicated region
        $region57: #{decoder_vit_block.2} parent=51 // pred_check
          %p358 = pneg %p143
        $region58: #{decoder_vit_block.2} parent=51 // pred_check_branch
          %360 = sbr.rel (%p358) target = $region60
        $region59: #{decoder_vit_block.2} parent=51 // pred_region
          %361 = dma.done [#allocation7], 16
        $region60: #{decoder_vit_block.2} parent=51 // pred_fallthru
          _
        // Predicated region
        $region61: #{decoder_vit_block.2} parent=51 // pred_check
          %p362 = pneg %p164
        $region62: #{decoder_vit_block.2} parent=51 // pred_check_branch
          %364 = sbr.rel (%p362) target = $region64
        $region63: #{decoder_vit_block.2} parent=51 // pred_region
          %365 = dma.done [#allocation7], 256
        $region64: #{decoder_vit_block.2} parent=51 // pred_fallthru
          _
        // Predicated region
        $region65: #{decoder_vit_block.2} parent=51 // pred_check
          %p366 = pneg %p185
        $region66: #{decoder_vit_block.2} parent=51 // pred_check_branch
          %368 = sbr.rel (%p366) target = $region68
        $region67: #{decoder_vit_block.2} parent=51 // pred_region
          %369 = dma.done [#allocation10], 16
        $region68: #{decoder_vit_block.2} parent=51 // pred_fallthru
          _
        %s370 = smul.u32 2, %s29
        %p371 = scmp.lt.s32.totalorder %s28, 1
        %s372 = scalar_select %p371, %s28, 1
        %p373 = scmp.lt.s32.totalorder %s370, 1
        %s374 = scalar_select %p373, %s370, 1
        %s375 = smul.addr %s372, 2
        %s376 = sadd.s32 %s374, %s375
        %s377 = smul.addr %s376, 8
        %s378 = scalar_lea.vmem %s0, %s377
        %p379 = pneg %p59
        %p380 = pneg %p56
        %p381 = pneg %p80
        %p382 = pneg %p77
        %p383 = pneg %p101
        %p384 = pneg %p98
        %p385 = pneg %p122
        %p386 = pneg %p119
        %p387 = pneg %p143
        %p388 = pneg %p140
        %p389 = pneg %p164
        %p390 = pneg %p161
        %p391 = pneg %p185
        %p392 = pneg %p182
        %p393 = pneg %p206
        %p394 = pneg %p203
        %p395 = pneg %p232
        %p396 = pneg %p229
        %p397 = scmp.lt.s32.totalorder %s28, 1
        %s398 = scalar_select %p397, %s28, 1
        %s399 = smul.addr %s398, 4
        %s400 = smul.addr %s399, 4
        %s401 = scalar_lea.vmem %s8, %s400
        %p402 = pneg %p258
        %p403 = pneg %p255
        %p404 = scmp.lt.s32.totalorder %s28, 1
        %s405 = scalar_select %p404, %s28, 1
        %s406 = scalar_lea.vmem %s9, %s405
        %s407 = smul.u32 2, %s29
        %p408 = scmp.lt.s32.totalorder %s28, 1
        %s409 = scalar_select %p408, %s28, 1
        %p410 = scmp.lt.s32.totalorder %s407, 1
        %s411 = scalar_select %p410, %s407, 1
        %s412 = smul.addr %s409, 2
        %s413 = sadd.s32 %s411, %s412
        %s414 = smul.addr %s413, 8
        %s415 = scalar_lea.vmem %s0, %s414
        %s416 = smul.u32 2, %s29
        %p417 = scmp.lt.s32.totalorder %s28, 1
        %s418 = scalar_select %p417, %s28, 1
        %s419 = smul.addr %s418, 4
        %s420 = smul.addr %s419, 4
        %s421 = scalar_lea.vmem %s8, %s420
        %p422 = scmp.lt.s32.totalorder %s28, 1
        %s423 = scalar_select %p422, %s28, 1
        %s424 = scalar_lea.vmem %s9, %s423
        %p426 = scmp.eq.s32.totalorder %s29, 0
        // Predicated region
        $region69: #{decoder_vit_block.2} parent=51 // pred_check
          %p427 = pneg %p426
        $region70: #{decoder_vit_block.2} parent=51 // pred_check_branch
          %429 = sbr.rel (%p427) target = $region72
        $region71: #{decoder_vit_block.2} parent=51 // pred_region
          %vm430 = vcmask 261120
          %431 = vst.msk [vmem:[#allocation2] sm:$0xff] %vm430, 0.0
          %432 = vst.msk [vmem:[#allocation2 + $0x8] sm:$0xff] %vm430, 0.0
          %433 = vst.msk [vmem:[#allocation2 + $0x10] sm:$0xff] %vm430, 0.0
          %434 = vst.msk [vmem:[#allocation2 + $0x18] sm:$0xff] %vm430, 0.0
          %vm435 = vcmask 253952
          %436 = vst.msk [vmem:[#allocation3] sm:$0x1] %vm435, 0.0
        $region72: #{decoder_vit_block.2} parent=51 // pred_fallthru
          _
        %v437 = vld [vmem:[%s415] sm:$0xff]
        %v438 = vld [vmem:[%s415 + $0x8] sm:$0xff]
        %v439 = vld [vmem:[%s1] sm:$0x1]
        %v440 = vld [vmem:[%s2] sm:$0x1]
        %vm441 = vcmask 261120
        %v442 = vsel %vm441, %v437, 0.0
        %443 = vadd.xlane.f32.xlu0 %v442
        %v444 = vpop.xlane.xlu0 %443
        %v445 = vsel %vm441, %v438, 0.0
        %446 = vadd.xlane.f32.xlu0 %v445
        %v447 = vpop.xlane.xlu0 %446
        %v448 = vrcp.pop 32.0
        %v449 = vmul.f32 %v444, %v448
        %v450 = vmul.f32 %v447, %v448
        %v451 = vsub.f32 %v437, %v449
        %v452 = vsub.f32 %v438, %v450
        %v453 = vmul.f32 %v451, %v451
        %v454 = vmul.f32 %v452, %v452
        %v455 = vsel %vm441, %v453, 0.0
        %456 = vadd.xlane.f32.xlu0 %v455
        %v457 = vpop.xlane.xlu0 %456
        %v458 = vsel %vm441, %v454, 0.0
        %459 = vadd.xlane.f32.xlu0 %v458
        %v460 = vpop.xlane.xlu0 %459
        %v461 = vmul.f32 %v457, %v448
        %v462 = vmul.f32 %v460, %v448
        %v463 = vadd.f32 %v461, 1e-05
        %v464 = vadd.f32 %v462, 1e-05
        %v465 = vrsqrt.pop %v463
        %v466 = vrsqrt.pop %v464
        %v467 = vmul.f32 %v451, %v465
        %v468 = vmul.f32 %v452, %v466
        %v470 = vlaneseq
        %v471 = vshrl.u32 %v470, 7
        %v472 = vsub.s32 0, %v471
        %v473 = vrot.slane %v439, %v472
        %v475 = vmul.f32 %v467, %v473
        %v476 = vmul.f32 %v468, %v473
        %v478 = vlaneseq
        %v479 = vshrl.u32 %v478, 7
        %v480 = vsub.s32 0, %v479
        %v481 = vrot.slane %v440, %v480
        %v483 = vadd.f32 %v475, %v481
        %v484 = vadd.f32 %v476, %v481
        %v485 = vpack.c.bf16 %v484, %v483
        %v486 = vld [vmem:[#allocation4] sm:$0xf]
        %v487 = vld [vmem:[#allocation4 + $0x4] sm:$0xf]
        %v488 = vld [vmem:[#allocation4 + $0x8] sm:$0xf]
        %v489 = vld [vmem:[#allocation4 + $0xc] sm:$0xf]
        %v490 = vld [vmem:[#allocation6] sm:$0x1]
        %v492 = vlaneseq
        %v493 = vshrl.u32 %v492, 7
        %v494 = vsub.s32 0, %v493
        %v495 = vrot.slane %v490, %v494
        %v501 = vunpack.c.l.b16 %v486
        %v502 = vunpack.c.l.b16 %v487
        %v503 = vunpack.c.l.b16 %v488
        %v504 = vunpack.c.l.b16 %v489
        %v505 = vpack.c.b16 %v502, %v501
        %v506 = vpack.c.b16 %v504, %v503
        %v510 = vsel %vm441, %v485, 0
        %512 = vmatprep.subr.bf16.mxu0 0
        %513 = vmatpush1.bf16.msra.mxu0 %v505
        %514 = vmatprep.subr.bf16.mxu0 0
        %515 = vmatpush1.bf16.msra.mxu0 %v506
        %516 = vmatprep.subr.bf16.mxu0 0
        %517 = vmatpush1.bf16.msra.mxu0 0
        %518 = vmatprep.subr.bf16.mxu0 0
        %519 = vmatpush1.bf16.msra.mxu0 0
        %520 = vmatprep.subr.bf16.mxu0 0
        %521 = vmatpush1.bf16.msra.mxu0 0
        %522 = vmatprep.subr.bf16.mxu0 0
        %523 = vmatpush1.bf16.msra.mxu0 0
        %524 = vmatprep.subr.bf16.mxu0 0
        %525 = vmatpush1.bf16.msra.mxu0 0
        %526 = vmatprep.subr.bf16.mxu0 0
        %527 = vmatpush1.bf16.msra.mxu0 0
        %528 = vmatprep.subr.bf16.mxu0 0
        %529 = vmatpush1.bf16.msra.mxu0 0
        %530 = vmatprep.subr.bf16.mxu0 0
        %531 = vmatpush1.bf16.msra.mxu0 0
        %532 = vmatprep.subr.bf16.mxu0 0
        %533 = vmatpush1.bf16.msra.mxu0 0
        %534 = vmatprep.subr.bf16.mxu0 0
        %535 = vmatpush1.bf16.msra.mxu0 0
        %536 = vmatprep.subr.bf16.mxu0 0
        %537 = vmatpush1.bf16.msra.mxu0 0
        %538 = vmatprep.subr.bf16.mxu0 0
        %539 = vmatpush1.bf16.msra.mxu0 0
        %540 = vmatprep.subr.bf16.mxu0 0
        %541 = vmatpush1.bf16.msra.mxu0 0
        %542 = vmatprep.subr.bf16.mxu0 0
        %543 = vmatpush1.bf16.msra.mxu0 0
        %544 = vmatprep.mubr.bf16.mxu0 0
        %545 = vmatmul.mubr.bf16.gmra.mrb[0].mxu0 %v510
        %v546 = vpop.f32.mrb[0].mxu0
        %v547 = vadd.f32 %v495, %v546
        %v548 = vpop.f32.mrb[0].mxu0
        %v549 = vpop.f32.mrb[0].mxu0
        %v550 = vadd.f32 %v495, %v549
        %v551 = vpop.f32.mrb[0].mxu0
        %552 = vdwg.mxu0
        %vm553 = vcmp.gt.f32.partialorder %v547, 0.0
        %vm554 = vcmp.gt.f32.partialorder %v550, 0.0
        %v555 = vadd.f32 %v547, 1.0
        %v556 = vadd.f32 %v550, 1.0
        %v557 = vmul.f32 %v547, 1.442695
        %v558 = vpow.pop %v557
        %v559 = vmul.f32 %v550, 1.442695
        %v560 = vpow.pop %v559
        %v561 = vsel %vm553, %v555, %v558
        %v562 = vsel %vm554, %v556, %v560
        %v563 = vld [vmem:[#allocation8] sm:$0xf]
        %v564 = vld [vmem:[#allocation8 + $0x4] sm:$0xf]
        %v565 = vld [vmem:[#allocation8 + $0x8] sm:$0xf]
        %v566 = vld [vmem:[#allocation8 + $0xc] sm:$0xf]
        %v567 = vld [vmem:[#allocation9] sm:$0x1]
        %v569 = vlaneseq
        %v570 = vshrl.u32 %v569, 7
        %v571 = vsub.s32 0, %v570
        %v572 = vrot.slane %v567, %v571
        %v578 = vunpack.c.l.b16 %v563
        %v579 = vunpack.c.l.b16 %v564
        %v580 = vunpack.c.l.b16 %v565
        %v581 = vunpack.c.l.b16 %v566
        %v582 = vpack.c.b16 %v579, %v578
        %v583 = vpack.c.b16 %v581, %v580
        %586 = vmatprep.subr.bf16.mxu0 0
        %587 = vmatpush1.bf16.msra.mxu0 %v582
        %588 = vmatprep.subr.bf16.mxu0 0
        %589 = vmatpush1.bf16.msra.mxu0 %v583
        %590 = vmatprep.subr.bf16.mxu0 0
        %591 = vmatpush1.bf16.msra.mxu0 0
        %592 = vmatprep.subr.bf16.mxu0 0
        %593 = vmatpush1.bf16.msra.mxu0 0
        %594 = vmatprep.subr.bf16.mxu0 0
        %595 = vmatpush1.bf16.msra.mxu0 0
        %596 = vmatprep.subr.bf16.mxu0 0
        %597 = vmatpush1.bf16.msra.mxu0 0
        %598 = vmatprep.subr.bf16.mxu0 0
        %599 = vmatpush1.bf16.msra.mxu0 0
        %600 = vmatprep.subr.bf16.mxu0 0
        %601 = vmatpush1.bf16.msra.mxu0 0
        %602 = vmatprep.subr.bf16.mxu0 0
        %603 = vmatpush1.bf16.msra.mxu0 0
        %604 = vmatprep.subr.bf16.mxu0 0
        %605 = vmatpush1.bf16.msra.mxu0 0
        %606 = vmatprep.subr.bf16.mxu0 0
        %607 = vmatpush1.bf16.msra.mxu0 0
        %608 = vmatprep.subr.bf16.mxu0 0
        %609 = vmatpush1.bf16.msra.mxu0 0
        %610 = vmatprep.subr.bf16.mxu0 0
        %611 = vmatpush1.bf16.msra.mxu0 0
        %612 = vmatprep.subr.bf16.mxu0 0
        %613 = vmatpush1.bf16.msra.mxu0 0
        %614 = vmatprep.subr.bf16.mxu0 0
        %615 = vmatpush1.bf16.msra.mxu0 0
        %616 = vmatprep.subr.bf16.mxu0 0
        %617 = vmatpush1.bf16.msra.mxu0 0
        %618 = vmatprep.mubr.bf16.mxu0 0
        %619 = vmatmul.mubr.bf16.gmra.mrb[0].mxu0 %v510
        %v620 = vpop.f32.mrb[0].mxu0
        %v621 = vadd.f32 %v572, %v620
        %v622 = vpop.f32.mrb[0].mxu0
        %v623 = vpop.f32.mrb[0].mxu0
        %v624 = vadd.f32 %v572, %v623
        %v625 = vpop.f32.mrb[0].mxu0
        %626 = vdwg.mxu0
        %v627 = vld [vmem:[#allocation2] sm:$0xff]
        %v628 = vld [vmem:[#allocation2 + $0x8] sm:$0xff]
        %v629 = vld [vmem:[#allocation2 + $0x10] sm:$0xff]
        %v630 = vld [vmem:[#allocation2 + $0x18] sm:$0xff]
        %v631 = vpack.c.bf16 %v562, %v561
        %v632 = vpack.c.bf16 %v624, %v621
        %633 = vxpose.xlu0.c.b16.start [1/8] %v631, 128
        %634 = vxpose.xlu0.c.b16.cont [2/8] 0, 128
        %635 = vxpose.xlu0.c.b16.cont [3/8] 0, 128
        %636 = vxpose.xlu0.c.b16.cont [4/8] 0, 128
        %637 = vxpose.xlu0.c.b16.cont [5/8] 0, 128
        %638 = vxpose.xlu0.c.b16.cont [6/8] 0, 128
        %639 = vxpose.xlu0.c.b16.cont [7/8] 0, 128
        %640 = vxpose.xlu0.c.b16.end [8/8] 0, 128
        %v641 = vpop.trf.xlu0
        %v642 = vpop.trf.xlu0
        %v643 = vpop.trf.xlu0
        %v644 = vpop.trf.xlu0
        %v645 = vpop.trf.xlu0
        %v646 = vpop.trf.xlu0
        %v647 = vpop.trf.xlu0
        %v648 = vpop.trf.xlu0
        %vm649 = vcmask 130048
        %v651 = vsel %vm649, %v641, 0
        %v654 = vsel %vm649, %v642, 0
        %656 = vmatprep.subr.bf16.mxu0 0
        %657 = vmatpush1.bf16.msra.mxu0 %v632
        %658 = vmatprep.subr.bf16.mxu0 0
        %659 = vmatpush1.bf16.msra.mxu0 0
        %660 = vmatprep.subr.bf16.mxu0 0
        %661 = vmatpush1.bf16.msra.mxu0 0
        %662 = vmatprep.subr.bf16.mxu0 0
        %663 = vmatpush1.bf16.msra.mxu0 0
        %664 = vmatprep.subr.bf16.mxu0 0
        %665 = vmatpush1.bf16.msra.mxu0 0
        %666 = vmatprep.subr.bf16.mxu0 0
        %667 = vmatpush1.bf16.msra.mxu0 0
        %668 = vmatprep.subr.bf16.mxu0 0
        %669 = vmatpush1.bf16.msra.mxu0 0
        %670 = vmatprep.subr.bf16.mxu0 0
        %671 = vmatpush1.bf16.msra.mxu0 0
        %672 = vmatprep.subr.bf16.mxu0 0
        %673 = vmatpush1.bf16.msra.mxu0 0
        %674 = vmatprep.subr.bf16.mxu0 0
        %675 = vmatpush1.bf16.msra.mxu0 0
        %676 = vmatprep.subr.bf16.mxu0 0
        %677 = vmatpush1.bf16.msra.mxu0 0
        %678 = vmatprep.subr.bf16.mxu0 0
        %679 = vmatpush1.bf16.msra.mxu0 0
        %680 = vmatprep.subr.bf16.mxu0 0
        %681 = vmatpush1.bf16.msra.mxu0 0
        %682 = vmatprep.subr.bf16.mxu0 0
        %683 = vmatpush1.bf16.msra.mxu0 0
        %684 = vmatprep.subr.bf16.mxu0 0
        %685 = vmatpush1.bf16.msra.mxu0 0
        %686 = vmatprep.subr.bf16.mxu0 0
        %687 = vmatpush1.bf16.msra.mxu0 0
        %688 = vmatprep.mubr.bf16.mxu0 0
        %689 = vmatmul.mubr.bf16.gmra.mrb[0].mxu0 %v651
        %v690 = vpop.f32.mrb[0].mxu0
        %v691 = vadd.f32 0.0, %v690
        %v692 = vpop.f32.mrb[0].mxu0
        %v693 = vpop.f32.mrb[0].mxu0
        %v694 = vadd.f32 0.0, %v693
        %v695 = vpop.f32.mrb[0].mxu0
        %696 = vmatprep.mubr.bf16.mxu0 0
        %697 = vmatmul.mubr.bf16.gmra.mrb[0].mxu0 %v654
        %v698 = vpop.f32.mrb[0].mxu0
        %v699 = vadd.f32 0.0, %v698
        %v700 = vpop.f32.mrb[0].mxu0
        %v701 = vpop.f32.mrb[0].mxu0
        %v702 = vadd.f32 0.0, %v701
        %v703 = vpop.f32.mrb[0].mxu0
        %704 = vdwg.mxu0
        %v705 = vadd.f32 %v627, %v691
        %v706 = vadd.f32 %v628, %v694
        %v707 = vadd.f32 %v629, %v699
        %v708 = vadd.f32 %v630, %v702
        %709 = vst.msk [vmem:[#allocation2] sm:$0xff] %vm441, %v705
        %710 = vst.msk [vmem:[#allocation2 + $0x8] sm:$0xff] %vm441, %v706
        %711 = vst.msk [vmem:[#allocation2 + $0x10] sm:$0xff] %vm441, %v707
        %712 = vst.msk [vmem:[#allocation2 + $0x18] sm:$0xff] %vm441, %v708
        %v713 = vld [vmem:[#allocation3] sm:$0x1]
        %v714 = vsel %vm441, %v561, 0.0
        %v715 = vsel %vm441, %v562, 0.0
        %v716 = vadd.f32 %v714, %v715
        %v717 = vrot.slane %v716, 4
        %v718 = vadd.f32 %v716, %v717
        %v719 = vrot.slane %v718, 2
        %v720 = vadd.f32 %v718, %v719
        %v721 = vrot.slane %v720, 1
        %v722 = vadd.f32 %v720, %v721
        %v723 = vadd.f32 %v713, %v722
        %vm724 = vcmask 253952
        %725 = vst.msk [vmem:[#allocation3] sm:$0x1] %vm724, %v723
        // Predicated region
        $region73: #{decoder_vit_block.2} parent=51 // pred_check
          %p726 = pneg %p426
        $region74: #{decoder_vit_block.2} parent=51 // pred_check_branch
          %728 = sbr.rel (%p726) target = $region76
        $region75: #{decoder_vit_block.2} parent=51 // pred_region
          %v729 = vld [vmem:[#allocation2] sm:$0xff]
          %v730 = vld [vmem:[#allocation2 + $0x8] sm:$0xff]
          %v731 = vld [vmem:[#allocation2 + $0x10] sm:$0xff]
          %v732 = vld [vmem:[#allocation2 + $0x18] sm:$0xff]
          %v733 = vmul.f32 %v729, 0.0625
          %v734 = vmul.f32 %v730, 0.0625
          %v735 = vmul.f32 %v731, 0.0625
          %v736 = vmul.f32 %v732, 0.0625
          %v737 = vld [vmem:[%s7] sm:$0xf]
          %v738 = vld [vmem:[%s7 + $0x4] sm:$0xf]
          %v739 = vld [vmem:[%s7 + $0x8] sm:$0xf]
          %v740 = vld [vmem:[%s7 + $0xc] sm:$0xf]
          %v741 = vunpack.c.l.bf16 %v737
          %v742 = vunpack.c.l.bf16 %v738
          %v743 = vunpack.c.l.bf16 %v739
          %v744 = vunpack.c.l.bf16 %v740
          %v745 = vmul.f32 %v733, %v741
          %v746 = vmul.f32 %v734, %v742
          %v747 = vmul.f32 %v735, %v743
          %v748 = vmul.f32 %v736, %v744
          %v749 = vpack.c.bf16 %v746, %v745
          %v750 = vpack.c.bf16 %v748, %v747
          %v753 = vunpack.c.l.b16 %v749
          %v754 = vunpack.c.h.b16 %v749
          %v755 = vunpack.c.l.b16 %v750
          %v756 = vunpack.c.h.b16 %v750
          %v757 = vpack.c.b16 %v753, %v753
          %v758 = vpack.c.b16 %v754, %v754
          %v759 = vpack.c.b16 %v755, %v755
          %v760 = vpack.c.b16 %v756, %v756
          %vm765 = vcmask 257024
          %766 = vst.msk [vmem:[%s421] sm:$0xf] %vm765, %v757
          %767 = vst.msk [vmem:[%s421 + $0x4] sm:$0xf] %vm765, %v758
          %768 = vst.msk [vmem:[%s421 + $0x8] sm:$0xf] %vm765, %v759
          %769 = vst.msk [vmem:[%s421 + $0xc] sm:$0xf] %vm765, %v760
          %v770 = vld [vmem:[#allocation3] sm:$0x1]
          %v771 = vmul.f32 %v770, 0.0625
          %772 = vst.msk [vmem:[%s424] sm:$0x1] %vm724, %v771
        $region76: #{decoder_vit_block.2} parent=51 // pred_fallthru
          _
        %p773 = scmp.lt.s32.totalorder %s28, 1
        %s774 = scalar_select %p773, %s28, 1
        %s775 = smul.addr %s774, 4
        %s776 = smul.addr %s775, 4
        %s777 = scalar_lea.vmem %s8, %s776
        %p778 = scmp.lt.s32.totalorder %s28, 1
        %s779 = scalar_select %p778, %s28, 1
        %s780 = scalar_lea.vmem %s9, %s779
        // Predicated region
        $region77: #{decoder_vit_block.2} parent=51 // pred_check
          %p781 = pneg %p229
        $region78: #{decoder_vit_block.2} parent=51 // pred_check_branch
          %783 = sbr.rel (%p781) target = $region80
        $region79: #{decoder_vit_block.2} parent=51 // pred_region
          _
        $region80: #{decoder_vit_block.2} parent=51 // pred_fallthru
          _
        // Predicated region
        $region81: #{decoder_vit_block.2} parent=51 // pred_check
          %p784 = pneg %p255
        $region82: #{decoder_vit_block.2} parent=51 // pred_check_branch
          %786 = sbr.rel (%p784) target = $region84
        $region83: #{decoder_vit_block.2} parent=51 // pred_region
          _
        $region84: #{decoder_vit_block.2} parent=51 // pred_fallthru
          _
      $region52: #{decoder_vit_block.2} parent=5 // pred_fallthru
        _
      %p787 = scmp.le.s32.totalorder 2, %s19
      // Predicated region
      $region85: #{decoder_vit_block.2} parent=5 // pred_check
        %p788 = pneg %p787
      $region86: #{decoder_vit_block.2} parent=5 // pred_check_branch
        %790 = sbr.rel (%p788) target = $region88
      $region87: #{decoder_vit_block.2} parent=5 // pred_region
        %s791 = ssub.s32 %s19, 2
        // Predicated region
        $region89: #{decoder_vit_block.2} parent=87 // pred_check
          %p792 = pneg %p235
        $region90: #{decoder_vit_block.2} parent=87 // pred_check_branch
          %794 = sbr.rel (%p792) target = $region92
        $region91: #{decoder_vit_block.2} parent=87 // pred_region
          %p795 = scmp.lt.s32.totalorder %s30, 1
          %s796 = scalar_select %p795, %s30, 1
          %s797 = smul.addr %s796, 4
          %s798 = smul.addr %s797, 4
          %s799 = scalar_lea.vmem %s8, %s798
        $region92: #{decoder_vit_block.2} parent=87 // pred_fallthru
          _
        // Predicated region
        $region93: #{decoder_vit_block.2} parent=87 // pred_check
          %p800 = pneg %p261
        $region94: #{decoder_vit_block.2} parent=87 // pred_check_branch
          %802 = sbr.rel (%p800) target = $region96
        $region95: #{decoder_vit_block.2} parent=87 // pred_region
          %p803 = scmp.lt.s32.totalorder %s30, 1
          %s804 = scalar_select %p803, %s30, 1
          %s805 = scalar_lea.vmem %s9, %s804
        $region96: #{decoder_vit_block.2} parent=87 // pred_fallthru
          _
      $region88: #{decoder_vit_block.2} parent=5 // pred_fallthru
        _
    $region6: #{decoder_vit_block.2} parent=1 // loop_footer
      %s23 = sadd.s32 1, %s19
    $region7: #{decoder_vit_block.2} parent=1 // loop_footer_branch
      %18 = sbr.rel target = $region3
    $region8: #{decoder_vit_block.2} parent=1 // loop_exit
      _
    %806 = vsyncpa [#allocation5], 1
    %s807 = scalar_lea.sflag [#allocation5], 1
    %808 = vsyncpa %s807, 1
    %809 = vsyncpa [#allocation7], 1
    %810 = vsyncpa [#allocation10], 1

// kernel: decoder_vit_block.3
$region0: #{decoder_vit_block.3}
  #allocation0 [shape = 'u32[]', space=smem, size = 0x4, offset = 0x4, fixed_abs, tag = 'smem constant byte address 0x4 - core index']
  #allocation1 [shape = 'u32[144,128]{1,0:T(1,128)}', space=vmem, size = 0x12000, scoped, tag = 'internal scratch']
  %s0 = inlined_call_operand.vmem [shape: f32[2,16,32], index: 0, kind: input, shape index: {}]
  %s1 = inlined_call_operand.vmem [shape: bf16[2,32,32], index: 1, kind: input, shape index: {}]
  %s2 = inlined_call_operand.vmem [shape: f32[2,1,32], index: 2, kind: input, shape index: {}]
  %s3 = inlined_call_operand.vmem [shape: bf16[32,32], index: 3, kind: input, shape index: {}]
  %s4 = inlined_call_operand.vmem [shape: f32[1,32], index: 4, kind: input, shape index: {}]
  %s5 = inlined_call_operand.vmem [shape: f32[1,32], index: 5, kind: input, shape index: {}]
  %s6 = inlined_call_operand.vmem [shape: bf16[32,32], index: 6, kind: input, shape index: {}]
  %s7 = inlined_call_operand.vmem [shape: f32[1,32], index: 7, kind: input, shape index: {}]
  %s8 = inlined_call_operand.vmem [shape: bf16[32,32], index: 8, kind: input, shape index: {}]
  %s9 = inlined_call_operand.vmem [shape: f32[1,32], index: 9, kind: input, shape index: {}]
  %s10 = inlined_call_operand.vmem [shape: f32[1,32], index: 10, kind: input, shape index: {}]
  %s11 = inlined_call_operand.vmem [shape: f32[1,32], index: 11, kind: input, shape index: {}]
  %s12 = inlined_call_operand.vmem [shape: bf16[32,128], index: 12, kind: input, shape index: {}]
  %s13 = inlined_call_operand.vmem [shape: bf16[128,32], index: 13, kind: input, shape index: {}]
  %s14 = inlined_call_operand.hbm [shape: f32[2,16,32], index: 14, kind: output, shape index: {}]
  %s15 = sld [smem:[#allocation0]]
  $region89: #{decoder_vit_block.3} parent=0
    _
  %s17 = ssub.s32 1, %s15
  %s18 = scalar_select 0, %s17, %s15
  $region1: #{decoder_vit_block.3} parent=0
    #allocation2 [shape = 'u8[16384]{0}', space=vmem, size = 0x4000, scoped, tag = 'output window, operand 0']
    #allocation3 [shape = 's32[2]{0}', space=sflag, size = 0x8, scoped, tag = 'scoped memory for decoder_vit_block.3']
    %19 = vsyncpa [#allocation3], 0
    %s20 = scalar_lea.sflag [#allocation3], 1
    %21 = vsyncpa %s20, 0
    loop: start=0, step=1, limit=4
    $region2: #{decoder_vit_block.3} parent=1 // loop_pre_header
      _
    $region3: #{decoder_vit_block.3} parent=1 // loop_header
      %s23 = sphi 0, %s27
      %p24 = scmp.ge.s32.totalorder %s23, 4
      %s30 = sphi 0, %s42
      %s31 = sphi 0, %s38
      %s32 = sphi 0, %s30
      %s33 = sphi 0, %s31
      %s34 = sphi 0, %s32
      %s35 = sphi 0, %s33
      %s47 = sphi 0, %s49
      %s50 = sphi 0, %s47
      %s51 = sphi 0, %s50
      %s67 = sphi 0, %s51
      %s73 = sphi 0, %s75
      %s76 = sphi 0, %s73
      %s77 = sphi 0, %s76
      %s93 = sphi 0, %s77
      %s99 = sphi 0, %s101
      %s102 = sphi 0, %s99
      %s103 = sphi 0, %s102
      %s119 = sphi 0, %s103
      %s123 = sphi 0, %s123
      %s125 = sphi 0, %s123
      %s126 = sphi 0, %s125
      %s140 = sphi 0, %s126
      %s144 = sphi 0, %s144
      %s146 = sphi 0, %s144
      %s147 = sphi 0, %s146
      %s161 = sphi 0, %s147
      %s165 = sphi 0, %s165
      %s167 = sphi 0, %s165
      %s168 = sphi 0, %s167
      %s182 = sphi 0, %s168
      %s186 = sphi 0, %s186
      %s188 = sphi 0, %s186
      %s189 = sphi 0, %s188
      %s203 = sphi 0, %s189
      %s207 = sphi 0, %s207
      %s209 = sphi 0, %s207
      %s210 = sphi 0, %s209
      %s224 = sphi 0, %s210
      %s228 = sphi 0, %s228
      %s230 = sphi 0, %s228
      %s231 = sphi 0, %s230
      %s245 = sphi 0, %s231
      %s249 = sphi 0, %s249
      %s251 = sphi 0, %s249
      %s252 = sphi 0, %s251
      %s266 = sphi 0, %s252
      %s270 = sphi 0, %s270
      %s272 = sphi 0, %s270
      %s273 = sphi 0, %s272
      %s287 = sphi 0, %s273
      %s291 = sphi 0, %s291
      %s293 = sphi 0, %s291
      %s294 = sphi 0, %s293
      %s308 = sphi 0, %s294
      %s312 = sphi 0, %s312
      %s314 = sphi 0, %s312
      %s315 = sphi 0, %s314
      %s329 = sphi 0, %s315
      %s333 = sphi 0, %s333
      %s335 = sphi 0, %s333
      %s336 = sphi 0, %s335
      %s350 = sphi 0, %s336
      %s358 = sphi 0, %s360
      %s361 = sphi 0, %s358
      %s362 = sphi 0, %s361
      %s378 = sphi 0, %s362
    $region4: #{decoder_vit_block.3} parent=1 // loop_header_branch
      %26 = sbr.rel (%p24) target = $region8
    $region5: #{decoder_vit_block.3} parent=1 // loop_body
      %s28 = ssub.s32 %s23, 1
      %s29 = ssub.s32 %s23, 2
      %s36 = sadd.s32 1, %s31
      %p37 = scmp.ge.s32.totalorder %s36, 1
      %s38 = scalar_select %p37, 0, %s36
      %s39 = sadd.s32 1, %s30
      %s40 = scalar_select %p37, %s39, %s30
      %p41 = scmp.ge.s32.totalorder %s40, 2
      %s42 = scalar_select %p41, 0, %s40
      %s43 = ssub.s32 %s30, %s42
      %s44 = ssub.s32 %s31, %s38
      %s45 = sor.u32 %s43, %s44
      %p46 = scmp.eq.s32.totalorder %s45, 0
      %s48 = sadd.s32 %s47, 1
      %s49 = scalar_select %p46, %s47, %s48
      %p52 = pneg %p46
      %p53 = scmp.eq.s32.totalorder %s23, 1
      %p54 = por %p52, %p53
      %p55 = scmp.ne.s32.totalorder %s47, %s50
      %p56 = scmp.eq.s32.totalorder %s23, 0
      %p57 = por %p55, %p56
      %p58 = scmp.ne.s32.totalorder %s47, %s50
      %p59 = scmp.eq.s32.totalorder %s28, 1
      %p60 = por %p58, %p59
      %p61 = scmp.ne.s32.totalorder %s50, %s51
      %p62 = scmp.eq.s32.totalorder %s28, 0
      %p63 = por %p61, %p62
      %p64 = scmp.ne.s32.totalorder %s50, %s51
      %p65 = scmp.eq.s32.totalorder %s29, 1
      %p66 = por %p64, %p65
      %p68 = scmp.ne.s32.totalorder %s51, %s67
      %p69 = scmp.eq.s32.totalorder %s29, 0
      %p70 = por %p68, %p69
      %s71 = ssub.s32 %s30, %s42
      %p72 = scmp.eq.s32.totalorder %s71, 0
      %s74 = sadd.s32 %s73, 1
      %s75 = scalar_select %p72, %s73, %s74
      %p78 = pneg %p72
      %p79 = scmp.eq.s32.totalorder %s23, 1
      %p80 = por %p78, %p79
      %p81 = scmp.ne.s32.totalorder %s73, %s76
      %p82 = scmp.eq.s32.totalorder %s23, 0
      %p83 = por %p81, %p82
      %p84 = scmp.ne.s32.totalorder %s73, %s76
      %p85 = scmp.eq.s32.totalorder %s28, 1
      %p86 = por %p84, %p85
      %p87 = scmp.ne.s32.totalorder %s76, %s77
      %p88 = scmp.eq.s32.totalorder %s28, 0
      %p89 = por %p87, %p88
      %p90 = scmp.ne.s32.totalorder %s76, %s77
      %p91 = scmp.eq.s32.totalorder %s29, 1
      %p92 = por %p90, %p91
      %p94 = scmp.ne.s32.totalorder %s77, %s93
      %p95 = scmp.eq.s32.totalorder %s29, 0
      %p96 = por %p94, %p95
      %s97 = ssub.s32 %s30, %s42
      %p98 = scmp.eq.s32.totalorder %s97, 0
      %s100 = sadd.s32 %s99, 1
      %s101 = scalar_select %p98, %s99, %s100
      %p104 = pneg %p98
      %p105 = scmp.eq.s32.totalorder %s23, 1
      %p106 = por %p104, %p105
      %p107 = scmp.ne.s32.totalorder %s99, %s102
      %p108 = scmp.eq.s32.totalorder %s23, 0
      %p109 = por %p107, %p108
      %p110 = scmp.ne.s32.totalorder %s99, %s102
      %p111 = scmp.eq.s32.totalorder %s28, 1
      %p112 = por %p110, %p111
      %p113 = scmp.ne.s32.totalorder %s102, %s103
      %p114 = scmp.eq.s32.totalorder %s28, 0
      %p115 = por %p113, %p114
      %p116 = scmp.ne.s32.totalorder %s102, %s103
      %p117 = scmp.eq.s32.totalorder %s29, 1
      %p118 = por %p116, %p117
      %p120 = scmp.ne.s32.totalorder %s103, %s119
      %p121 = scmp.eq.s32.totalorder %s29, 0
      %p122 = por %p120, %p121
      %s124 = sadd.s32 %s123, 1
      %p127 = scmp.eq.s32.totalorder %s23, 1
      %p128 = scmp.ne.s32.totalorder %s123, %s125
      %p129 = scmp.eq.s32.totalorder %s23, 0
      %p130 = por %p128, %p129
      %p131 = scmp.ne.s32.totalorder %s123, %s125
      %p132 = scmp.eq.s32.totalorder %s28, 1
      %p133 = por %p131, %p132
      %p134 = scmp.ne.s32.totalorder %s125, %s126
      %p135 = scmp.eq.s32.totalorder %s28, 0
      %p136 = por %p134, %p135
      %p137 = scmp.ne.s32.totalorder %s125, %s126
      %p138 = scmp.eq.s32.totalorder %s29, 1
      %p139 = por %p137, %p138
      %p141 = scmp.ne.s32.totalorder %s126, %s140
      %p142 = scmp.eq.s32.totalorder %s29, 0
      %p143 = por %p141, %p142
      %s145 = sadd.s32 %s144, 1
      %p148 = scmp.eq.s32.totalorder %s23, 1
      %p149 = scmp.ne.s32.totalorder %s144, %s146
      %p150 = scmp.eq.s32.totalorder %s23, 0
      %p151 = por %p149, %p150
      %p152 = scmp.ne.s32.totalorder %s144, %s146
      %p153 = scmp.eq.s32.totalorder %s28, 1
      %p154 = por %p152, %p153
      %p155 = scmp.ne.s32.totalorder %s146, %s147
      %p156 = scmp.eq.s32.totalorder %s28, 0
      %p157 = por %p155, %p156
      %p158 = scmp.ne.s32.totalorder %s146, %s147
      %p159 = scmp.eq.s32.totalorder %s29, 1
      %p160 = por %p158, %p159
      %p162 = scmp.ne.s32.totalorder %s147, %s161
      %p163 = scmp.eq.s32.totalorder %s29, 0
      %p164 = por %p162, %p163
      %s166 = sadd.s32 %s165, 1
      %p169 = scmp.eq.s32.totalorder %s23, 1
      %p170 = scmp.ne.s32.totalorder %s165, %s167
      %p171 = scmp.eq.s32.totalorder %s23, 0
      %p172 = por %p170, %p171
      %p173 = scmp.ne.s32.totalorder %s165, %s167
      %p174 = scmp.eq.s32.totalorder %s28, 1
      %p175 = por %p173, %p174
      %p176 = scmp.ne.s32.totalorder %s167, %s168
      %p177 = scmp.eq.s32.totalorder %s28, 0
      %p178 = por %p176, %p177
      %p179 = scmp.ne.s32.totalorder %s167, %s168
      %p180 = scmp.eq.s32.totalorder %s29, 1
      %p181 = por %p179, %p180
      %p183 = scmp.ne.s32.totalorder %s168, %s182
      %p184 = scmp.eq.s32.totalorder %s29, 0
      %p185 = por %p183, %p184
      %s187 = sadd.s32 %s186, 1
      %p190 = scmp.eq.s32.totalorder %s23, 1
      %p191 = scmp.ne.s32.totalorder %s186, %s188
      %p192 = scmp.eq.s32.totalorder %s23, 0
      %p193 = por %p191, %p192
      %p194 = scmp.ne.s32.totalorder %s186, %s188
      %p195 = scmp.eq.s32.totalorder %s28, 1
      %p196 = por %p194, %p195
      %p197 = scmp.ne.s32.totalorder %s188, %s189
      %p198 = scmp.eq.s32.totalorder %s28, 0
      %p199 = por %p197, %p198
      %p200 = scmp.ne.s32.totalorder %s188, %s189
      %p201 = scmp.eq.s32.totalorder %s29, 1
      %p202 = por %p200, %p201
      %p204 = scmp.ne.s32.totalorder %s189, %s203
      %p205 = scmp.eq.s32.totalorder %s29, 0
      %p206 = por %p204, %p205
      %s208 = sadd.s32 %s207, 1
      %p211 = scmp.eq.s32.totalorder %s23, 1
      %p212 = scmp.ne.s32.totalorder %s207, %s209
      %p213 = scmp.eq.s32.totalorder %s23, 0
      %p214 = por %p212, %p213
      %p215 = scmp.ne.s32.totalorder %s207, %s209
      %p216 = scmp.eq.s32.totalorder %s28, 1
      %p217 = por %p215, %p216
      %p218 = scmp.ne.s32.totalorder %s209, %s210
      %p219 = scmp.eq.s32.totalorder %s28, 0
      %p220 = por %p218, %p219
      %p221 = scmp.ne.s32.totalorder %s209, %s210
      %p222 = scmp.eq.s32.totalorder %s29, 1
      %p223 = por %p221, %p222
      %p225 = scmp.ne.s32.totalorder %s210, %s224
      %p226 = scmp.eq.s32.totalorder %s29, 0
      %p227 = por %p225, %p226
      %s229 = sadd.s32 %s228, 1
      %p232 = scmp.eq.s32.totalorder %s23, 1
      %p233 = scmp.ne.s32.totalorder %s228, %s230
      %p234 = scmp.eq.s32.totalorder %s23, 0
      %p235 = por %p233, %p234
      %p236 = scmp.ne.s32.totalorder %s228, %s230
      %p237 = scmp.eq.s32.totalorder %s28, 1
      %p238 = por %p236, %p237
      %p239 = scmp.ne.s32.totalorder %s230, %s231
      %p240 = scmp.eq.s32.totalorder %s28, 0
      %p241 = por %p239, %p240
      %p242 = scmp.ne.s32.totalorder %s230, %s231
      %p243 = scmp.eq.s32.totalorder %s29, 1
      %p244 = por %p242, %p243
      %p246 = scmp.ne.s32.totalorder %s231, %s245
      %p247 = scmp.eq.s32.totalorder %s29, 0
      %p248 = por %p246, %p247
      %s250 = sadd.s32 %s249, 1
      %p253 = scmp.eq.s32.totalorder %s23, 1
      %p254 = scmp.ne.s32.totalorder %s249, %s251
      %p255 = scmp.eq.s32.totalorder %s23, 0
      %p256 = por %p254, %p255
      %p257 = scmp.ne.s32.totalorder %s249, %s251
      %p258 = scmp.eq.s32.totalorder %s28, 1
      %p259 = por %p257, %p258
      %p260 = scmp.ne.s32.totalorder %s251, %s252
      %p261 = scmp.eq.s32.totalorder %s28, 0
      %p262 = por %p260, %p261
      %p263 = scmp.ne.s32.totalorder %s251, %s252
      %p264 = scmp.eq.s32.totalorder %s29, 1
      %p265 = por %p263, %p264
      %p267 = scmp.ne.s32.totalorder %s252, %s266
      %p268 = scmp.eq.s32.totalorder %s29, 0
      %p269 = por %p267, %p268
      %s271 = sadd.s32 %s270, 1
      %p274 = scmp.eq.s32.totalorder %s23, 1
      %p275 = scmp.ne.s32.totalorder %s270, %s272
      %p276 = scmp.eq.s32.totalorder %s23, 0
      %p277 = por %p275, %p276
      %p278 = scmp.ne.s32.totalorder %s270, %s272
      %p279 = scmp.eq.s32.totalorder %s28, 1
      %p280 = por %p278, %p279
      %p281 = scmp.ne.s32.totalorder %s272, %s273
      %p282 = scmp.eq.s32.totalorder %s28, 0
      %p283 = por %p281, %p282
      %p284 = scmp.ne.s32.totalorder %s272, %s273
      %p285 = scmp.eq.s32.totalorder %s29, 1
      %p286 = por %p284, %p285
      %p288 = scmp.ne.s32.totalorder %s273, %s287
      %p289 = scmp.eq.s32.totalorder %s29, 0
      %p290 = por %p288, %p289
      %s292 = sadd.s32 %s291, 1
      %p295 = scmp.eq.s32.totalorder %s23, 1
      %p296 = scmp.ne.s32.totalorder %s291, %s293
      %p297 = scmp.eq.s32.totalorder %s23, 0
      %p298 = por %p296, %p297
      %p299 = scmp.ne.s32.totalorder %s291, %s293
      %p300 = scmp.eq.s32.totalorder %s28, 1
      %p301 = por %p299, %p300
      %p302 = scmp.ne.s32.totalorder %s293, %s294
      %p303 = scmp.eq.s32.totalorder %s28, 0
      %p304 = por %p302, %p303
      %p305 = scmp.ne.s32.totalorder %s293, %s294
      %p306 = scmp.eq.s32.totalorder %s29, 1
      %p307 = por %p305, %p306
      %p309 = scmp.ne.s32.totalorder %s294, %s308
      %p310 = scmp.eq.s32.totalorder %s29, 0
      %p311 = por %p309, %p310
      %s313 = sadd.s32 %s312, 1
      %p316 = scmp.eq.s32.totalorder %s23, 1
      %p317 = scmp.ne.s32.totalorder %s312, %s314
      %p318 = scmp.eq.s32.totalorder %s23, 0
      %p319 = por %p317, %p318
      %p320 = scmp.ne.s32.totalorder %s312, %s314
      %p321 = scmp.eq.s32.totalorder %s28, 1
      %p322 = por %p320, %p321
      %p323 = scmp.ne.s32.totalorder %s314, %s315
      %p324 = scmp.eq.s32.totalorder %s28, 0
      %p325 = por %p323, %p324
      %p326 = scmp.ne.s32.totalorder %s314, %s315
      %p327 = scmp.eq.s32.totalorder %s29, 1
      %p328 = por %p326, %p327
      %p330 = scmp.ne.s32.totalorder %s315, %s329
      %p331 = scmp.eq.s32.totalorder %s29, 0
      %p332 = por %p330, %p331
      %s334 = sadd.s32 %s333, 1
      %p337 = scmp.eq.s32.totalorder %s23, 1
      %p338 = scmp.ne.s32.totalorder %s333, %s335
      %p339 = scmp.eq.s32.totalorder %s23, 0
      %p340 = por %p338, %p339
      %p341 = scmp.ne.s32.totalorder %s333, %s335
      %p342 = scmp.eq.s32.totalorder %s28, 1
      %p343 = por %p341, %p342
      %p344 = scmp.ne.s32.totalorder %s335, %s336
      %p345 = scmp.eq.s32.totalorder %s28, 0
      %p346 = por %p344, %p345
      %p347 = scmp.ne.s32.totalorder %s335, %s336
      %p348 = scmp.eq.s32.totalorder %s29, 1
      %p349 = por %p347, %p348
      %p351 = scmp.ne.s32.totalorder %s336, %s350
      %p352 = scmp.eq.s32.totalorder %s29, 0
      %p353 = por %p351, %p352
      %s354 = ssub.s32 %s30, %s42
      %s355 = ssub.s32 %s31, %s38
      %s356 = sor.u32 %s354, %s355
      %p357 = scmp.eq.s32.totalorder %s356, 0
      %s359 = sadd.s32 %s358, 1
      %s360 = scalar_select %p357, %s358, %s359
      %p363 = pneg %p357
      %p364 = scmp.eq.s32.totalorder %s23, 1
      %p365 = por %p363, %p364
      %p366 = scmp.ne.s32.totalorder %s358, %s361
      %p367 = scmp.eq.s32.totalorder %s23, 0
      %p368 = por %p366, %p367
      %p369 = scmp.ne.s32.totalorder %s358, %s361
      %p370 = scmp.eq.s32.totalorder %s28, 1
      %p371 = por %p369, %p370
      %p372 = scmp.ne.s32.totalorder %s361, %s362
      %p373 = scmp.eq.s32.totalorder %s28, 0
      %p374 = por %p372, %p373
      %p375 = scmp.ne.s32.totalorder %s361, %s362
      %p376 = scmp.eq.s32.totalorder %s29, 1
      %p377 = por %p375, %p376
      %p379 = scmp.ne.s32.totalorder %s362, %s378
      %p380 = scmp.eq.s32.totalorder %s29, 0
      %p381 = por %p379, %p380
      %p382 = scmp.le.s32.totalorder 1, %s23
      %p383 = scmp.lt.s32.totalorder %s23, 3
      %p384 = pnand %p382, %p383
      %p385 = pneg %p384
      // Predicated region
      $region9: #{decoder_vit_block.3} parent=5 // pred_check
        _
      $region10: #{decoder_vit_block.3} parent=5 // pred_check_branch
        %387 = sbr.rel (%p384) target = $region12
      $region11: #{decoder_vit_block.3} parent=5 // pred_region
        %s388 = ssub.s32 %s23, 1
        // Predicated region
        $region13: #{decoder_vit_block.3} parent=11 // pred_check
          %p389 = pneg %p136
        $region14: #{decoder_vit_block.3} parent=11 // pred_check_branch
          %391 = sbr.rel (%p389) target = $region16
        $region15: #{decoder_vit_block.3} parent=11 // pred_region
          _
        $region16: #{decoder_vit_block.3} parent=11 // pred_fallthru
          _
        // Predicated region
        $region17: #{decoder_vit_block.3} parent=11 // pred_check
          %p392 = pneg %p157
        $region18: #{decoder_vit_block.3} parent=11 // pred_check_branch
          %394 = sbr.rel (%p392) target = $region20
        $region19: #{decoder_vit_block.3} parent=11 // pred_region
          _
        $region20: #{decoder_vit_block.3} parent=11 // pred_fallthru
          _
        // Predicated region
        $region21: #{decoder_vit_block.3} parent=11 // pred_check
          %p395 = pneg %p178
        $region22: #{decoder_vit_block.3} parent=11 // pred_check_branch
          %397 = sbr.rel (%p395) target = $region24
        $region23: #{decoder_vit_block.3} parent=11 // pred_region
          _
        $region24: #{decoder_vit_block.3} parent=11 // pred_fallthru
          _
        // Predicated region
        $region25: #{decoder_vit_block.3} parent=11 // pred_check
          %p398 = pneg %p199
        $region26: #{decoder_vit_block.3} parent=11 // pred_check_branch
          %400 = sbr.rel (%p398) target = $region28
        $region27: #{decoder_vit_block.3} parent=11 // pred_region
          _
        $region28: #{decoder_vit_block.3} parent=11 // pred_fallthru
          _
        // Predicated region
        $region29: #{decoder_vit_block.3} parent=11 // pred_check
          %p401 = pneg %p220
        $region30: #{decoder_vit_block.3} parent=11 // pred_check_branch
          %403 = sbr.rel (%p401) target = $region32
        $region31: #{decoder_vit_block.3} parent=11 // pred_region
          _
        $region32: #{decoder_vit_block.3} parent=11 // pred_fallthru
          _
        // Predicated region
        $region33: #{decoder_vit_block.3} parent=11 // pred_check
          %p404 = pneg %p241
        $region34: #{decoder_vit_block.3} parent=11 // pred_check_branch
          %406 = sbr.rel (%p404) target = $region36
        $region35: #{decoder_vit_block.3} parent=11 // pred_region
          _
        $region36: #{decoder_vit_block.3} parent=11 // pred_fallthru
          _
        // Predicated region
        $region37: #{decoder_vit_block.3} parent=11 // pred_check
          %p407 = pneg %p262
        $region38: #{decoder_vit_block.3} parent=11 // pred_check_branch
          %409 = sbr.rel (%p407) target = $region40
        $region39: #{decoder_vit_block.3} parent=11 // pred_region
          _
        $region40: #{decoder_vit_block.3} parent=11 // pred_fallthru
          _
        // Predicated region
        $region41: #{decoder_vit_block.3} parent=11 // pred_check
          %p410 = pneg %p283
        $region42: #{decoder_vit_block.3} parent=11 // pred_check_branch
          %412 = sbr.rel (%p410) target = $region44
        $region43: #{decoder_vit_block.3} parent=11 // pred_region
          _
        $region44: #{decoder_vit_block.3} parent=11 // pred_fallthru
          _
        // Predicated region
        $region45: #{decoder_vit_block.3} parent=11 // pred_check
          %p413 = pneg %p304
        $region46: #{decoder_vit_block.3} parent=11 // pred_check_branch
          %415 = sbr.rel (%p413) target = $region48
        $region47: #{decoder_vit_block.3} parent=11 // pred_region
          _
        $region48: #{decoder_vit_block.3} parent=11 // pred_fallthru
          _
        // Predicated region
        $region49: #{decoder_vit_block.3} parent=11 // pred_check
          %p416 = pneg %p325
        $region50: #{decoder_vit_block.3} parent=11 // pred_check_branch
          %418 = sbr.rel (%p416) target = $region52
        $region51: #{decoder_vit_block.3} parent=11 // pred_region
          _
        $region52: #{decoder_vit_block.3} parent=11 // pred_fallthru
          _
        // Predicated region
        $region53: #{decoder_vit_block.3} parent=11 // pred_check
          %p419 = pneg %p346
        $region54: #{decoder_vit_block.3} parent=11 // pred_check_branch
          %421 = sbr.rel (%p419) target = $region56
        $region55: #{decoder_vit_block.3} parent=11 // pred_region
          _
        $region56: #{decoder_vit_block.3} parent=11 // pred_fallthru
          _
      $region12: #{decoder_vit_block.3} parent=5 // pred_fallthru
        _
      %p422 = scmp.lt.s32.totalorder %s23, 2
      // Predicated region
      $region57: #{decoder_vit_block.3} parent=5 // pred_check
        %p423 = pneg %p422
      $region58: #{decoder_vit_block.3} parent=5 // pred_check_branch
        %425 = sbr.rel (%p423) target = $region60
      $region59: #{decoder_vit_block.3} parent=5 // pred_region
        // Predicated region
        $region61: #{decoder_vit_block.3} parent=59 // pred_check
          %p426 = pneg %p57
        $region62: #{decoder_vit_block.3} parent=59 // pred_check_branch
          %428 = sbr.rel (%p426) target = $region64
        $region63: #{decoder_vit_block.3} parent=59 // pred_region
          %s429 = smul.u32 2, %s31
          %p430 = scmp.lt.s32.totalorder %s30, 1
          %s431 = scalar_select %p430, %s30, 1
          %p432 = scmp.lt.s32.totalorder %s429, 1
          %s433 = scalar_select %p432, %s429, 1
          %s434 = smul.addr %s431, 2
          %s435 = sadd.s32 %s433, %s434
          %s436 = smul.addr %s435, 8
          %s437 = scalar_lea.vmem %s0, %s436
          %s438 = smul.u32 2, %s31
        $region64: #{decoder_vit_block.3} parent=59 // pred_fallthru
          _
        // Predicated region
        $region65: #{decoder_vit_block.3} parent=59 // pred_check
          %p439 = pneg %p83
        $region66: #{decoder_vit_block.3} parent=59 // pred_check_branch
          %441 = sbr.rel (%p439) target = $region68
        $region67: #{decoder_vit_block.3} parent=59 // pred_region
          %p442 = scmp.lt.s32.totalorder %s30, 1
          %s443 = scalar_select %p442, %s30, 1
          %s444 = smul.addr %s443, 4
          %s445 = smul.addr %s444, 4
          %s446 = scalar_lea.vmem %s1, %s445
        $region68: #{decoder_vit_block.3} parent=59 // pred_fallthru
          _
        // Predicated region
        $region69: #{decoder_vit_block.3} parent=59 // pred_check
          %p447 = pneg %p109
        $region70: #{decoder_vit_block.3} parent=59 // pred_check_branch
          %449 = sbr.rel (%p447) target = $region72
        $region71: #{decoder_vit_block.3} parent=59 // pred_region
          %p450 = scmp.lt.s32.totalorder %s30, 1
          %s451 = scalar_select %p450, %s30, 1
          %s452 = scalar_lea.vmem %s2, %s451
        $region72: #{decoder_vit_block.3} parent=59 // pred_fallthru
          _
      $region60: #{decoder_vit_block.3} parent=5 // pred_fallthru
        _
      %p453 = scmp.le.s32.totalorder 1, %s23
      %p454 = scmp.lt.s32.totalorder %s23, 3
      %p455 = pnand %p453, %p454
      %p456 = pneg %p455
      // Predicated region
      $region73: #{decoder_vit_block.3} parent=5 // pred_check
        _
      $region74: #{decoder_vit_block.3} parent=5 // pred_check_branch
        %458 = sbr.rel (%p455) target = $region76
      $region75: #{decoder_vit_block.3} parent=5 // pred_region
        %s459 = ssub.s32 %s23, 1
        %s460 = smul.u32 2, %s33
        %p461 = scmp.lt.s32.totalorder %s32, 1
        %s462 = scalar_select %p461, %s32, 1
        %p463 = scmp.lt.s32.totalorder %s460, 1
        %s464 = scalar_select %p463, %s460, 1
        %s465 = smul.addr %s462, 2
        %s466 = sadd.s32 %s464, %s465
        %s467 = smul.addr %s466, 8
        %s468 = scalar_lea.vmem %s0, %s467
        %p469 = pneg %p63
        %p470 = pneg %p60
        %p471 = scmp.lt.s32.totalorder %s32, 1
        %s472 = scalar_select %p471, %s32, 1
        %s473 = smul.addr %s472, 4
        %s474 = smul.addr %s473, 4
        %s475 = scalar_lea.vmem %s1, %s474
        %p476 = pneg %p89
        %p477 = pneg %p86
        %p478 = scmp.lt.s32.totalorder %s32, 1
        %s479 = scalar_select %p478, %s32, 1
        %s480 = scalar_lea.vmem %s2, %s479
        %p481 = pneg %p115
        %p482 = pneg %p112
        %p483 = pneg %p136
        %p484 = pneg %p133
        %p485 = pneg %p157
        %p486 = pneg %p154
        %p487 = pneg %p178
        %p488 = pneg %p175
        %p489 = pneg %p199
        %p490 = pneg %p196
        %p491 = pneg %p220
        %p492 = pneg %p217
        %p493 = pneg %p241
        %p494 = pneg %p238
        %p495 = pneg %p262
        %p496 = pneg %p259
        %p497 = pneg %p283
        %p498 = pneg %p280
        %p499 = pneg %p304
        %p500 = pneg %p301
        %p501 = pneg %p325
        %p502 = pneg %p322
        %p503 = pneg %p346
        %p504 = pneg %p343
        %p505 = pneg %p374
        %p506 = pneg %p371
        %s507 = sand.u32 %s361, 1
        %s508 = scalar_lea.sflag [#allocation3], %s507
        %s509 = sand.u32 %s361, 1
        %s510 = smul.addr %s509, 16
        %s511 = scalar_lea.vmem [#allocation2], %s510
        %s512 = smul.u32 2, %s33
        %p513 = scmp.lt.s32.totalorder %s32, 1
        %s514 = scalar_select %p513, %s32, 1
        %p515 = scmp.lt.s32.totalorder %s512, 1
        %s516 = scalar_select %p515, %s512, 1
        %s517 = smul.addr %s514, 2
        %s518 = sadd.s32 %s516, %s517
        %s519 = smul.addr %s518, 8
        %s520 = scalar_lea.vmem %s0, %s519
        %s521 = smul.u32 2, %s33
        %p522 = scmp.lt.s32.totalorder %s32, 1
        %s523 = scalar_select %p522, %s32, 1
        %s524 = smul.addr %s523, 4
        %s525 = smul.addr %s524, 4
        %s526 = scalar_lea.vmem %s1, %s525
        %p527 = scmp.lt.s32.totalorder %s32, 1
        %s528 = scalar_select %p527, %s32, 1
        %s529 = scalar_lea.vmem %s2, %s528
        %s530 = smul.u32 2, %s33
        %v532 = vld [vmem:[%s520] sm:$0xff]
        %v533 = vld [vmem:[%s520 + $0x8] sm:$0xff]
        %v534 = vld [vmem:[%s4] sm:$0x1]
        %v535 = vld [vmem:[%s5] sm:$0x1]
        %vm536 = vcmask 261120
        %v537 = vsel %vm536, %v532, 0.0
        %538 = vadd.xlane.f32.xlu0 %v537
        %v539 = vpop.xlane.xlu0 %538
        %v540 = vsel %vm536, %v533, 0.0
        %541 = vadd.xlane.f32.xlu0 %v540
        %v542 = vpop.xlane.xlu0 %541
        %v543 = vrcp.pop 32.0
        %v544 = vmul.f32 %v539, %v543
        %v545 = vmul.f32 %v542, %v543
        %v546 = vsub.f32 %v532, %v544
        %v547 = vsub.f32 %v533, %v545
        %v548 = vmul.f32 %v546, %v546
        %v549 = vmul.f32 %v547, %v547
        %v550 = vsel %vm536, %v548, 0.0
        %551 = vadd.xlane.f32.xlu0 %v550
        %v552 = vpop.xlane.xlu0 %551
        %v553 = vsel %vm536, %v549, 0.0
        %554 = vadd.xlane.f32.xlu0 %v553
        %v555 = vpop.xlane.xlu0 %554
        %v556 = vmul.f32 %v552, %v543
        %v557 = vmul.f32 %v555, %v543
        %v558 = vadd.f32 %v556, 1e-05
        %v559 = vadd.f32 %v557, 1e-05
        %v560 = vrsqrt.pop %v558
        %v561 = vrsqrt.pop %v559
        %v562 = vmul.f32 %v546, %v560
        %v563 = vmul.f32 %v547, %v561
        %v565 = vlaneseq
        %v566 = vshrl.u32 %v565, 7
        %v567 = vsub.s32 0, %v566
        %v568 = vrot.slane %v534, %v567
        %v570 = vmul.f32 %v562, %v568
        %v571 = vmul.f32 %v563, %v568
        %v573 = vlaneseq
        %v574 = vshrl.u32 %v573, 7
        %v575 = vsub.s32 0, %v574
        %v576 = vrot.slane %v535, %v575
        %v578 = vadd.f32 %v570, %v576
        %v579 = vadd.f32 %v571, %v576
        %v580 = vpack.c.bf16 %v579, %v578
        %v581 = vld [vmem:[%s6] sm:$0xf]
        %v582 = vld [vmem:[%s6 + $0x4] sm:$0xf]
        %v583 = vld [vmem:[%s6 + $0x8] sm:$0xf]
        %v584 = vld [vmem:[%s6 + $0xc] sm:$0xf]
        %v585 = vld [vmem:[%s7] sm:$0x1]
        %v587 = vlaneseq
        %v588 = vshrl.u32 %v587, 7
        %v589 = vsub.s32 0, %v588
        %v590 = vrot.slane %v585, %v589
        %v596 = vunpack.c.l.b16 %v581
        %v597 = vunpack.c.l.b16 %v582
        %v598 = vunpack.c.l.b16 %v583
        %v599 = vunpack.c.l.b16 %v584
        %v600 = vpack.c.b16 %v597, %v596
        %v601 = vpack.c.b16 %v599, %v598
        %v605 = vsel %vm536, %v580, 0
        %607 = vmatprep.subr.bf16.mxu0 0
        %608 = vmatpush1.bf16.msra.mxu0 %v600
        %609 = vmatprep.subr.bf16.mxu0 0
        %610 = vmatpush1.bf16.msra.mxu0 %v601
        %611 = vmatprep.subr.bf16.mxu0 0
        %612 = vmatpush1.bf16.msra.mxu0 0
        %613 = vmatprep.subr.bf16.mxu0 0
        %614 = vmatpush1.bf16.msra.mxu0 0
        %615 = vmatprep.subr.bf16.mxu0 0
        %616 = vmatpush1.bf16.msra.mxu0 0
        %617 = vmatprep.subr.bf16.mxu0 0
        %618 = vmatpush1.bf16.msra.mxu0 0
        %619 = vmatprep.subr.bf16.mxu0 0
        %620 = vmatpush1.bf16.msra.mxu0 0
        %621 = vmatprep.subr.bf16.mxu0 0
        %622 = vmatpush1.bf16.msra.mxu0 0
        %623 = vmatprep.subr.bf16.mxu0 0
        %624 = vmatpush1.bf16.msra.mxu0 0
        %625 = vmatprep.subr.bf16.mxu0 0
        %626 = vmatpush1.bf16.msra.mxu0 0
        %627 = vmatprep.subr.bf16.mxu0 0
        %628 = vmatpush1.bf16.msra.mxu0 0
        %629 = vmatprep.subr.bf16.mxu0 0
        %630 = vmatpush1.bf16.msra.mxu0 0
        %631 = vmatprep.subr.bf16.mxu0 0
        %632 = vmatpush1.bf16.msra.mxu0 0
        %633 = vmatprep.subr.bf16.mxu0 0
        %634 = vmatpush1.bf16.msra.mxu0 0
        %635 = vmatprep.subr.bf16.mxu0 0
        %636 = vmatpush1.bf16.msra.mxu0 0
        %637 = vmatprep.subr.bf16.mxu0 0
        %638 = vmatpush1.bf16.msra.mxu0 0
        %639 = vmatprep.mubr.bf16.mxu0 0
        %640 = vmatmul.mubr.bf16.gmra.mrb[0].mxu0 %v605
        %v641 = vpop.f32.mrb[0].mxu0
        %v642 = vadd.f32 %v590, %v641
        %v643 = vpop.f32.mrb[0].mxu0
        %v644 = vpop.f32.mrb[0].mxu0
        %v645 = vadd.f32 %v590, %v644
        %v646 = vpop.f32.mrb[0].mxu0
        %647 = vdwg.mxu0
        %vm648 = vcmp.gt.f32.partialorder %v642, 0.0
        %vm649 = vcmp.gt.f32.partialorder %v645, 0.0
        %v650 = vadd.f32 %v642, 1.0
        %v651 = vadd.f32 %v645, 1.0
        %v652 = vmul.f32 %v642, 1.442695
        %v653 = vpow.pop %v652
        %v654 = vmul.f32 %v645, 1.442695
        %v655 = vpow.pop %v654
        %v656 = vsel %vm648, %v650, %v653
        %v657 = vsel %vm649, %v651, %v655
        %v658 = vpack.c.bf16 %v657, %v656
        %v659 = vld [vmem:[%s526] sm:$0xf]
        %v660 = vld [vmem:[%s526 + $0x4] sm:$0xf]
        %v661 = vld [vmem:[%s526 + $0x8] sm:$0xf]
        %v662 = vld [vmem:[%s526 + $0xc] sm:$0xf]
        %v667 = vunpack.c.l.b16 %v659
        %v668 = vunpack.c.l.b16 %v660
        %v669 = vunpack.c.l.b16 %v661
        %v670 = vunpack.c.l.b16 %v662
        %v671 = vpack.c.b16 %v668, %v667
        %v672 = vpack.c.b16 %v670, %v669
        %v676 = vsel %vm536, %v658, 0
        %678 = vmatprep.subr.bf16.mxu0 0
        %679 = vmatpush1.bf16.msra.mxu0 %v671
        %680 = vmatprep.subr.bf16.mxu0 0
        %681 = vmatpush1.bf16.msra.mxu0 %v672
        %682 = vmatprep.subr.bf16.mxu0 0
        %683 = vmatpush1.bf16.msra.mxu0 0
        %684 = vmatprep.subr.bf16.mxu0 0
        %685 = vmatpush1.bf16.msra.mxu0 0
        %686 = vmatprep.subr.bf16.mxu0 0
        %687 = vmatpush1.bf16.msra.mxu0 0
        %688 = vmatprep.subr.bf16.mxu0 0
        %689 = vmatpush1.bf16.msra.mxu0 0
        %690 = vmatprep.subr.bf16.mxu0 0
        %691 = vmatpush1.bf16.msra.mxu0 0
        %692 = vmatprep.subr.bf16.mxu0 0
        %693 = vmatpush1.bf16.msra.mxu0 0
        %694 = vmatprep.subr.bf16.mxu0 0
        %695 = vmatpush1.bf16.msra.mxu0 0
        %696 = vmatprep.subr.bf16.mxu0 0
        %697 = vmatpush1.bf16.msra.mxu0 0
        %698 = vmatprep.subr.bf16.mxu0 0
        %699 = vmatpush1.bf16.msra.mxu0 0
        %700 = vmatprep.subr.bf16.mxu0 0
        %701 = vmatpush1.bf16.msra.mxu0 0
        %702 = vmatprep.subr.bf16.mxu0 0
        %703 = vmatpush1.bf16.msra.mxu0 0
        %704 = vmatprep.subr.bf16.mxu0 0
        %705 = vmatpush1.bf16.msra.mxu0 0
        %706 = vmatprep.subr.bf16.mxu0 0
        %707 = vmatpush1.bf16.msra.mxu0 0
        %708 = vmatprep.subr.bf16.mxu0 0
        %709 = vmatpush1.bf16.msra.mxu0 0
        %710 = vmatprep.mubr.bf16.mxu0 0
        %711 = vmatmul.mubr.bf16.gmra.mrb[0].mxu0 %v676
        %v712 = vpop.f32.mrb[0].mxu0
        %v713 = vadd.f32 0.0, %v712
        %v714 = vpop.f32.mrb[0].mxu0
        %v715 = vpop.f32.mrb[0].mxu0
        %v716 = vadd.f32 0.0, %v715
        %v717 = vpop.f32.mrb[0].mxu0
        %718 = vdwg.mxu0
        %v719 = vld [vmem:[%s529] sm:$0x1]
        %v721 = vlaneseq
        %v722 = vshrl.u32 %v721, 7
        %v723 = vsub.s32 0, %v722
        %v724 = vrot.slane %v719, %v723
        %v726 = vmul.f32 %v656, %v724
        %v727 = vmul.f32 %v657, %v724
        %v728 = vpack.c.bf16 %v727, %v726
        %v729 = vld [vmem:[%s3] sm:$0xf]
        %v730 = vld [vmem:[%s3 + $0x4] sm:$0xf]
        %v731 = vld [vmem:[%s3 + $0x8] sm:$0xf]
        %v732 = vld [vmem:[%s3 + $0xc] sm:$0xf]
        %v737 = vunpack.c.l.b16 %v729
        %v738 = vunpack.c.l.b16 %v730
        %v739 = vunpack.c.l.b16 %v731
        %v740 = vunpack.c.l.b16 %v732
        %v741 = vpack.c.b16 %v738, %v737
        %v742 = vpack.c.b16 %v740, %v739
        %v746 = vsel %vm536, %v728, 0
        %748 = vmatprep.subr.bf16.mxu0 0
        %749 = vmatpush1.bf16.msra.mxu0 %v741
        %750 = vmatprep.subr.bf16.mxu0 0
        %751 = vmatpush1.bf16.msra.mxu0 %v742
        %752 = vmatprep.subr.bf16.mxu0 0
        %753 = vmatpush1.bf16.msra.mxu0 0
        %754 = vmatprep.subr.bf16.mxu0 0
        %755 = vmatpush1.bf16.msra.mxu0 0
        %756 = vmatprep.subr.bf16.mxu0 0
        %757 = vmatpush1.bf16.msra.mxu0 0
        %758 = vmatprep.subr.bf16.mxu0 0
        %759 = vmatpush1.bf16.msra.mxu0 0
        %760 = vmatprep.subr.bf16.mxu0 0
        %761 = vmatpush1.bf16.msra.mxu0 0
        %762 = vmatprep.subr.bf16.mxu0 0
        %763 = vmatpush1.bf16.msra.mxu0 0
        %764 = vmatprep.subr.bf16.mxu0 0
        %765 = vmatpush1.bf16.msra.mxu0 0
        %766 = vmatprep.subr.bf16.mxu0 0
        %767 = vmatpush1.bf16.msra.mxu0 0
        %768 = vmatprep.subr.bf16.mxu0 0
        %769 = vmatpush1.bf16.msra.mxu0 0
        %770 = vmatprep.subr.bf16.mxu0 0
        %771 = vmatpush1.bf16.msra.mxu0 0
        %772 = vmatprep.subr.bf16.mxu0 0
        %773 = vmatpush1.bf16.msra.mxu0 0
        %774 = vmatprep.subr.bf16.mxu0 0
        %775 = vmatpush1.bf16.msra.mxu0 0
        %776 = vmatprep.subr.bf16.mxu0 0
        %777 = vmatpush1.bf16.msra.mxu0 0
        %778 = vmatprep.subr.bf16.mxu0 0
        %779 = vmatpush1.bf16.msra.mxu0 0
        %780 = vmatprep.mubr.bf16.mxu0 0
        %781 = vmatmul.mubr.bf16.gmra.mrb[0].mxu0 %v746
        %v782 = vpop.f32.mrb[0].mxu0
        %v783 = vadd.f32 1e-06, %v782
        %v784 = vpop.f32.mrb[0].mxu0
        %v785 = vpop.f32.mrb[0].mxu0
        %v786 = vadd.f32 1e-06, %v785
        %v787 = vpop.f32.mrb[0].mxu0
        %788 = vdwg.mxu0
        %v789 = vrcp.pop %v783
        %v790 = vmul.f32 %v713, %v789
        %v791 = vrcp.pop %v786
        %v792 = vmul.f32 %v716, %v791
        %v793 = vpack.c.bf16 %v792, %v790
        %v794 = vld [vmem:[%s8] sm:$0xf]
        %v795 = vld [vmem:[%s8 + $0x4] sm:$0xf]
        %v796 = vld [vmem:[%s8 + $0x8] sm:$0xf]
        %v797 = vld [vmem:[%s8 + $0xc] sm:$0xf]
        %v798 = vld [vmem:[%s9] sm:$0x1]
        %v800 = vlaneseq
        %v801 = vshrl.u32 %v800, 7
        %v802 = vsub.s32 0, %v801
        %v803 = vrot.slane %v798, %v802
        %v809 = vunpack.c.l.b16 %v794
        %v810 = vunpack.c.l.b16 %v795
        %v811 = vunpack.c.l.b16 %v796
        %v812 = vunpack.c.l.b16 %v797
        %v813 = vpack.c.b16 %v810, %v809
        %v814 = vpack.c.b16 %v812, %v811
        %v818 = vsel %vm536, %v793, 0
        %820 = vmatprep.subr.bf16.mxu0 0
        %821 = vmatpush1.bf16.msra.mxu0 %v813
        %822 = vmatprep.subr.bf16.mxu0 0
        %823 = vmatpush1.bf16.msra.mxu0 %v814
        %824 = vmatprep.subr.bf16.mxu0 0
        %825 = vmatpush1.bf16.msra.mxu0 0
        %826 = vmatprep.subr.bf16.mxu0 0
        %827 = vmatpush1.bf16.msra.mxu0 0
        %828 = vmatprep.subr.bf16.mxu0 0
        %829 = vmatpush1.bf16.msra.mxu0 0
        %830 = vmatprep.subr.bf16.mxu0 0
        %831 = vmatpush1.bf16.msra.mxu0 0
        %832 = vmatprep.subr.bf16.mxu0 0
        %833 = vmatpush1.bf16.msra.mxu0 0
        %834 = vmatprep.subr.bf16.mxu0 0
        %835 = vmatpush1.bf16.msra.mxu0 0
        %836 = vmatprep.subr.bf16.mxu0 0
        %837 = vmatpush1.bf16.msra.mxu0 0
        %838 = vmatprep.subr.bf16.mxu0 0
        %839 = vmatpush1.bf16.msra.mxu0 0
        %840 = vmatprep.subr.bf16.mxu0 0
        %841 = vmatpush1.bf16.msra.mxu0 0
        %842 = vmatprep.subr.bf16.mxu0 0
        %843 = vmatpush1.bf16.msra.mxu0 0
        %844 = vmatprep.subr.bf16.mxu0 0
        %845 = vmatpush1.bf16.msra.mxu0 0
        %846 = vmatprep.subr.bf16.mxu0 0
        %847 = vmatpush1.bf16.msra.mxu0 0
        %848 = vmatprep.subr.bf16.mxu0 0
        %849 = vmatpush1.bf16.msra.mxu0 0
        %850 = vmatprep.subr.bf16.mxu0 0
        %851 = vmatpush1.bf16.msra.mxu0 0
        %852 = vmatprep.mubr.bf16.mxu0 0
        %853 = vmatmul.mubr.bf16.gmra.mrb[0].mxu0 %v818
        %v854 = vpop.f32.mrb[0].mxu0
        %v855 = vadd.f32 %v803, %v854
        %v856 = vpop.f32.mrb[0].mxu0
        %v857 = vpop.f32.mrb[0].mxu0
        %v858 = vadd.f32 %v803, %v857
        %v859 = vpop.f32.mrb[0].mxu0
        %860 = vdwg.mxu0
        %v861 = vadd.f32 %v532, %v855
        %v862 = vadd.f32 %v533, %v858
        %v863 = vld [vmem:[%s10] sm:$0x1]
        %v864 = vld [vmem:[%s11] sm:$0x1]
        %v865 = vsel %vm536, %v861, 0.0
        %866 = vadd.xlane.f32.xlu0 %v865
        %v867 = vpop.xlane.xlu0 %866
        %v868 = vsel %vm536, %v862, 0.0
        %869 = vadd.xlane.f32.xlu0 %v868
        %v870 = vpop.xlane.xlu0 %869
        %v871 = vmul.f32 %v867, %v543
        %v872 = vmul.f32 %v870, %v543
        %v873 = vsub.f32 %v861, %v871
        %v874 = vsub.f32 %v862, %v872
        %v875 = vmul.f32 %v873, %v873
        %v876 = vmul.f32 %v874, %v874
        %v877 = vsel %vm536, %v875, 0.0
        %878 = vadd.xlane.f32.xlu0 %v877
        %v879 = vpop.xlane.xlu0 %878
        %v880 = vsel %vm536, %v876, 0.0
        %881 = vadd.xlane.f32.xlu0 %v880
        %v882 = vpop.xlane.xlu0 %881
        %v883 = vmul.f32 %v879, %v543
        %v884 = vmul.f32 %v882, %v543
        %v885 = vadd.f32 %v883, 1e-05
        %v886 = vadd.f32 %v884, 1e-05
        %v887 = vrsqrt.pop %v885
        %v888 = vrsqrt.pop %v886
        %v889 = vmul.f32 %v873, %v887
        %v890 = vmul.f32 %v874, %v888
        %v892 = vlaneseq
        %v893 = vshrl.u32 %v892, 7
        %v894 = vsub.s32 0, %v893
        %v895 = vrot.slane %v863, %v894
        %v897 = vmul.f32 %v889, %v895
        %v898 = vmul.f32 %v890, %v895
        %v900 = vlaneseq
        %v901 = vshrl.u32 %v900, 7
        %v902 = vsub.s32 0, %v901
        %v903 = vrot.slane %v864, %v902
        %v905 = vadd.f32 %v897, %v903
        %v906 = vadd.f32 %v898, %v903
        %v907 = vpack.c.bf16 %v906, %v905
        %v908 = vld [vmem:[%s12] sm:$0xf]
        %v909 = vld [vmem:[%s12 + $0x4] sm:$0xf]
        %v910 = vld [vmem:[%s12 + $0x8] sm:$0xf]
        %v911 = vld [vmem:[%s12 + $0xc] sm:$0xf]
        %v916 = vunpack.c.l.b16 %v908
        %v917 = vunpack.c.l.b16 %v909
        %v918 = vunpack.c.l.b16 %v910
        %v919 = vunpack.c.l.b16 %v911
        %v920 = vpack.c.b16 %v917, %v916
        %v921 = vpack.c.b16 %v919, %v918
        %v925 = vsel %vm536, %v907, 0
        %927 = vmatprep.subr.bf16.mxu0 0
        %928 = vmatpush1.bf16.msra.mxu0 %v920
        %929 = vmatprep.subr.bf16.mxu0 0
        %930 = vmatpush1.bf16.msra.mxu0 %v921
        %931 = vmatprep.subr.bf16.mxu0 0
        %932 = vmatpush1.bf16.msra.mxu0 0
        %933 = vmatprep.subr.bf16.mxu0 0
        %934 = vmatpush1.bf16.msra.mxu0 0
        %935 = vmatprep.subr.bf16.mxu0 0
        %936 = vmatpush1.bf16.msra.mxu0 0
        %937 = vmatprep.subr.bf16.mxu0 0
        %938 = vmatpush1.bf16.msra.mxu0 0
        %939 = vmatprep.subr.bf16.mxu0 0
        %940 = vmatpush1.bf16.msra.mxu0 0
        %941 = vmatprep.subr.bf16.mxu0 0
        %942 = vmatpush1.bf16.msra.mxu0 0
        %943 = vmatprep.subr.bf16.mxu0 0
        %944 = vmatpush1.bf16.msra.mxu0 0
        %945 = vmatprep.subr.bf16.mxu0 0
        %946 = vmatpush1.bf16.msra.mxu0 0
        %947 = vmatprep.subr.bf16.mxu0 0
        %948 = vmatpush1.bf16.msra.mxu0 0
        %949 = vmatprep.subr.bf16.mxu0 0
        %950 = vmatpush1.bf16.msra.mxu0 0
        %951 = vmatprep.subr.bf16.mxu0 0
        %952 = vmatpush1.bf16.msra.mxu0 0
        %953 = vmatprep.subr.bf16.mxu0 0
        %954 = vmatpush1.bf16.msra.mxu0 0
        %955 = vmatprep.subr.bf16.mxu0 0
        %956 = vmatpush1.bf16.msra.mxu0 0
        %957 = vmatprep.subr.bf16.mxu0 0
        %958 = vmatpush1.bf16.msra.mxu0 0
        %959 = vmatprep.mubr.bf16.mxu0 0
        %960 = vmatmul.mubr.bf16.gmra.mrb[0].mxu0 %v925
        %v961 = vpop.f32.mrb[0].mxu0
        %v962 = vadd.f32 0.0, %v961
        %v963 = vpop.f32.mrb[0].mxu0
        %v964 = vpop.f32.mrb[0].mxu0
        %v965 = vadd.f32 0.0, %v964
        %v966 = vpop.f32.mrb[0].mxu0
        %967 = vdwg.mxu0
        %v968 = vmul.f32 %v962, 0.5
        %v969 = vmul.f32 %v965, 0.5
        %v970 = vmul.f32 %v962, 0.70710677
        %v971 = vmul.f32 %v965, 0.70710677
        %v972 = verf.f32.pop %v970
        %v973 = verf.f32.pop %v971
        %v974 = vadd.f32 %v972, 1.0
        %v975 = vadd.f32 %v973, 1.0
        %v976 = vmul.f32 %v968, %v974
        %v977 = vmul.f32 %v969, %v975
        %v978 = vpack.c.bf16 %v977, %v976
        %v979 = vld [vmem:[%s13] sm:$0xf]
        %v980 = vld [vmem:[%s13 + $0x4] sm:$0xf]
        %v981 = vld [vmem:[%s13 + $0x8] sm:$0xf]
        %v982 = vld [vmem:[%s13 + $0xc] sm:$0xf]
        %v983 = vld [vmem:[%s13 + $0x10] sm:$0xf]
        %v984 = vld [vmem:[%s13 + $0x14] sm:$0xf]
        %v985 = vld [vmem:[%s13 + $0x18] sm:$0xf]
        %v986 = vld [vmem:[%s13 + $0x1c] sm:$0xf]
        %v987 = vld [vmem:[%s13 + $0x20] sm:$0xf]
        %v988 = vld [vmem:[%s13 + $0x24] sm:$0xf]
        %v989 = vld [vmem:[%s13 + $0x28] sm:$0xf]
        %v990 = vld [vmem:[%s13 + $0x2c] sm:$0xf]
        %v991 = vld [vmem:[%s13 + $0x30] sm:$0xf]
        %v992 = vld [vmem:[%s13 + $0x34] sm:$0xf]
        %v993 = vld [vmem:[%s13 + $0x38] sm:$0xf]
        %v994 = vld [vmem:[%s13 + $0x3c] sm:$0xf]
        %v1011 = vunpack.c.l.b16 %v979
        %v1012 = vunpack.c.l.b16 %v980
        %v1013 = vunpack.c.l.b16 %v981
        %v1014 = vunpack.c.l.b16 %v982
        %v1015 = vunpack.c.l.b16 %v983
        %v1016 = vunpack.c.l.b16 %v984
        %v1017 = vunpack.c.l.b16 %v985
        %v1018 = vunpack.c.l.b16 %v986
        %v1019 = vunpack.c.l.b16 %v987
        %v1020 = vunpack.c.l.b16 %v988
        %v1021 = vunpack.c.l.b16 %v989
        %v1022 = vunpack.c.l.b16 %v990
        %v1023 = vunpack.c.l.b16 %v991
        %v1024 = vunpack.c.l.b16 %v992
        %v1025 = vunpack.c.l.b16 %v993
        %v1026 = vunpack.c.l.b16 %v994
        %v1027 = vpack.c.b16 %v1012, %v1011
        %v1028 = vpack.c.b16 %v1014, %v1013
        %v1029 = vpack.c.b16 %v1016, %v1015
        %v1030 = vpack.c.b16 %v1018, %v1017
        %v1031 = vpack.c.b16 %v1020, %v1019
        %v1032 = vpack.c.b16 %v1022, %v1021
        %v1033 = vpack.c.b16 %v1024, %v1023
        %v1034 = vpack.c.b16 %v1026, %v1025
        %1043 = vmatprep.subr.bf16.mxu0 0
        %1044 = vmatpush1.bf16.msra.mxu0 %v1027
        %1045 = vmatprep.subr.bf16.mxu0 0
        %1046 = vmatpush1.bf16.msra.mxu0 %v1028
        %1047 = vmatprep.subr.bf16.mxu0 0
        %1048 = vmatpush1.bf16.msra.mxu0 %v1029
        %1049 = vmatprep.subr.bf16.mxu0 0
        %1050 = vmatpush1.bf16.msra.mxu0 %v1030
        %1051 = vmatprep.subr.bf16.mxu0 0
        %1052 = vmatpush1.bf16.msra.mxu0 %v1031
        %1053 = vmatprep.subr.bf16.mxu0 0
        %1054 = vmatpush1.bf16.msra.mxu0 %v1032
        %1055 = vmatprep.subr.bf16.mxu0 0
        %1056 = vmatpush1.bf16.msra.mxu0 %v1033
        %1057 = vmatprep.subr.bf16.mxu0 0
        %1058 = vmatpush1.bf16.msra.mxu0 %v1034
        %1059 = vmatprep.subr.bf16.mxu0 0
        %1060 = vmatpush1.bf16.msra.mxu0 0
        %1061 = vmatprep.subr.bf16.mxu0 0
        %1062 = vmatpush1.bf16.msra.mxu0 0
        %1063 = vmatprep.subr.bf16.mxu0 0
        %1064 = vmatpush1.bf16.msra.mxu0 0
        %1065 = vmatprep.subr.bf16.mxu0 0
        %1066 = vmatpush1.bf16.msra.mxu0 0
        %1067 = vmatprep.subr.bf16.mxu0 0
        %1068 = vmatpush1.bf16.msra.mxu0 0
        %1069 = vmatprep.subr.bf16.mxu0 0
        %1070 = vmatpush1.bf16.msra.mxu0 0
        %1071 = vmatprep.subr.bf16.mxu0 0
        %1072 = vmatpush1.bf16.msra.mxu0 0
        %1073 = vmatprep.subr.bf16.mxu0 0
        %1074 = vmatpush1.bf16.msra.mxu0 0
        %1075 = vmatprep.mubr.bf16.mxu0 0
        %1076 = vmatmul.mubr.bf16.gmra.mrb[0].mxu0 %v978
        %v1077 = vpop.f32.mrb[0].mxu0
        %v1078 = vadd.f32 0.0, %v1077
        %v1079 = vpop.f32.mrb[0].mxu0
        %v1080 = vpop.f32.mrb[0].mxu0
        %v1081 = vadd.f32 0.0, %v1080
        %v1082 = vpop.f32.mrb[0].mxu0
        %1083 = vdwg.mxu0
        %v1084 = vadd.f32 %v861, %v1078
        %v1085 = vadd.f32 %v862, %v1081
        %1086 = vst.msk [vmem:[%s511] sm:$0xff] %vm536, %v1084
        %1087 = vst.msk [vmem:[%s511 + $0x8] sm:$0xff] %vm536, %v1085
        %s1088 = sand.u32 %s361, 1
        %s1089 = scalar_lea.sflag [#allocation3], %s1088
        %s1090 = sand.u32 %s361, 1
        %s1091 = smul.addr %s1090, 16
        %s1092 = scalar_lea.vmem [#allocation2], %s1091
        // Predicated region
        $region77: #{decoder_vit_block.3} parent=75 // pred_check
          %p1093 = pneg %p371
        $region78: #{decoder_vit_block.3} parent=75 // pred_check_branch
          %1095 = sbr.rel (%p1093) target = $region80
        $region79: #{decoder_vit_block.3} parent=75 // pred_region
          %s1096 = smul.u32 2, %s33
          %s1098 = ssub.s32 256, 256
          %1099 = vsyncadd %s1089, %s1098
          %s1100 = smul.addr %s32, 2
          %s1101 = sadd.s32 %s1096, %s1100
          %s1102 = smul.addr %s1101, 128
          %s1103 = scalar_lea.hbm %s14, %s1102
          %s1104 = sshll.u32 %s1092, 4
          %s1105 = int_to_ptr.vmem [resolvable:$true] %s1104
          %1110 = dma.vmem_to_hbm [thread:$0]  %s1105, 256, %s1103, %s1089, 128, 128, 8
        $region80: #{decoder_vit_block.3} parent=75 // pred_fallthru
          _
      $region76: #{decoder_vit_block.3} parent=5 // pred_fallthru
        _
      %p1111 = scmp.le.s32.totalorder 2, %s23
      // Predicated region
      $region81: #{decoder_vit_block.3} parent=5 // pred_check
        %p1112 = pneg %p1111
      $region82: #{decoder_vit_block.3} parent=5 // pred_check_branch
        %1114 = sbr.rel (%p1112) target = $region84
      $region83: #{decoder_vit_block.3} parent=5 // pred_region
        %s1115 = ssub.s32 %s23, 2
        // Predicated region
        $region85: #{decoder_vit_block.3} parent=83 // pred_check
          %p1116 = pneg %p377
        $region86: #{decoder_vit_block.3} parent=83 // pred_check_branch
          %1118 = sbr.rel (%p1116) target = $region88
        $region87: #{decoder_vit_block.3} parent=83 // pred_region
          %s1119 = sand.u32 %s362, 1
          %s1120 = scalar_lea.sflag [#allocation3], %s1119
          %s1121 = sand.u32 %s362, 1
          %s1122 = smul.addr %s1121, 16
          %s1123 = scalar_lea.vmem [#allocation2], %s1122
          %1124 = dma.done %s1120, 256
        $region88: #{decoder_vit_block.3} parent=83 // pred_fallthru
          _
      $region84: #{decoder_vit_block.3} parent=5 // pred_fallthru
        _
    $region6: #{decoder_vit_block.3} parent=1 // loop_footer
      %s27 = sadd.s32 1, %s23
    $region7: #{decoder_vit_block.3} parent=1 // loop_footer_branch
      %22 = sbr.rel target = $region3
    $region8: #{decoder_vit_block.3} parent=1 // loop_exit
      _
    %1125 = vsyncpa [#allocation3], 1
    %s1126 = scalar_lea.sflag [#allocation3], 1
    %1127 = vsyncpa %s1126, 1

</llo_original>
